<compile_context>
chip_gen: v6e
topology: v6e:2x2x1
jax: 0.10.0
libtpu: 0.0.40
codegen_flags: <defaults>
</compile_context>

<pallas_src>
import math
from functools import partial

import jax
import jax.numpy as jnp
from jax.experimental import pallas as pl
from jax.experimental.pallas import tpu as pltpu

# ---------------------------------------------------------------------------
# model dims (small, consistent with the module: features divisible by heads)
# ---------------------------------------------------------------------------
B = 2          # batch
S = 8          # sequence length (tokens)
F = 64         # features
H = 4          # heads
D = F // H     # head dim
FF = 4 * F     # SwiGLU hidden
EPS = 1e-6


# ---------------------------------------------------------------------------
# fused transformer-block kernel (one grid step == `nb` batch elements)
# ---------------------------------------------------------------------------
def transformer_kernel(x_ref,            # (nb, S, F)
                       prenorm_w_ref,    # (1, F)
                       wqkv_ref,         # (F, 3F)   packed QKV (scale folded into Q cols)
                       wo_ref,           # (F, F)    fused out_proj @ out_linear
                       bo_ref,           # (1, F)    Attention.out bias
                       postnorm_w_ref,   # (1, F)
                       wgu_ref,          # (F, 2FF)  [gate | up]
                       wd_ref,           # (FF, F)
                       out_ref,          # (nb, S, F)
                       *, nb):
    R = nb * S
    x = x_ref[...].reshape(R, F)                     # merge leading dims only

    def rmsnorm(v, w):
        ms = jnp.mean(v * v, axis=-1, keepdims=True)
        return (v * jax.lax.rsqrt(ms + EPS)) * w     # w broadcasts (1, F)

    # ---------------- attention branch ----------------
    hpre = rmsnorm(x, prenorm_w_ref[...])
    qkv = jnp.dot(hpre, wqkv_ref[...],
                  preferred_element_type=jnp.float32)            # (R, 3F)

    attn_rows = []
    for b in range(nb):                               # static unrolled (nb <= 2)
        r0 = b * S
        acc = None
        for hh in range(H):                           # static unrolled over heads
            c = hh * D
            qh = qkv[r0:r0 + S, c:c + D]              # (S, D) (scale pre-folded)
            kh = qkv[r0:r0 + S, F + c:F + c + D]
            vh = qkv[r0:r0 + S, 2 * F + c:2 * F + c + D]

            s = jnp.dot(qh, kh.T, preferred_element_type=jnp.float32)   # (S, S)
            s = s - jnp.max(s, axis=-1, keepdims=True)
            p = jnp.exp(s)
            p = p * pl.reciprocal(jnp.sum(p, axis=-1, keepdims=True), approx=True)

            oh = jnp.dot(p, vh, preferred_element_type=jnp.float32)     # (S, D)
            # push this head straight through its slice of the fused projection
            contrib = jnp.dot(oh, wo_ref[c:c + D, :],
                              preferred_element_type=jnp.float32)       # (S, F)
            acc = contrib if acc is None else acc + contrib
        attn_rows.append(acc)

    attn = attn_rows[0] if nb == 1 else jnp.concatenate(attn_rows, axis=0)
    x1 = attn + bo_ref[...] + x                       # residual 1 (+ out bias)

    # ---------------- SwiGLU MLP branch ----------------
    h2 = rmsnorm(x1, postnorm_w_ref[...])
    gu = jnp.dot(h2, wgu_ref[...], preferred_element_type=jnp.float32)  # (R, 2FF)
    g = gu[:, :FF]                                    # 128-lane aligned slices
    u = gu[:, FF:]
    act = (g * jax.nn.sigmoid(g)) * u                 # silu(gate) * up
    m = jnp.dot(act, wd_ref[...], preferred_element_type=jnp.float32)   # (R, F)

    out_ref[...] = (m + x1).reshape(nb, S, F)         # residual 2


def transformer_block(x, kparams, *, batch_per_step=None):
    """x: (B, S, F) float32 -> (B, S, F) float32."""
    if batch_per_step is None:
        kind = jax.devices()[0].device_kind.lower()
        # v7x has 2 TensorCores/chip -> keep a 2-wide parallel grid (1 batch/TC).
        # v5e / v6e are single-TC -> collapse the batch into a single grid step.
        batch_per_step = 1 if "v7" in kind else B
    nb = batch_per_step
    n_steps = B // nb

    kernel = partial(transformer_kernel, nb=nb)
    full = lambda shape: pl.BlockSpec(shape, lambda i: tuple(0 for _ in shape))
    in_specs = [
        pl.BlockSpec((nb, S, F), lambda i: (i, 0, 0)),   # x
        full((1, F)),            # prenorm weight
        full((F, 3 * F)),        # packed wqkv
        full((F, F)),            # fused output projection
        full((1, F)),            # output bias
        full((1, F)),            # postnorm weight
        full((F, 2 * FF)),       # fused [gate | up]
        full((FF, F)),           # down
    ]
    return pl.pallas_call(
        kernel,
        out_shape=jax.ShapeDtypeStruct((B, S, F), jnp.float32),
        grid=(n_steps,),
        in_specs=in_specs,
        out_specs=pl.BlockSpec((nb, S, F), lambda i: (i, 0, 0)),
        compiler_params=pltpu.CompilerParams(dimension_semantics=("parallel",)),
    )(x, *kparams)


# ---------------------------------------------------------------------------
# parameter prep: one-time weight transforms (fusions + scale fold)
# ---------------------------------------------------------------------------
def prepare_kernel_params(module_params):
    (prenorm_w, wqkv, wo_proj, wo_lin, bo_lin, postnorm_w, wg, wu, wd) = module_params
    scale = 1.0 / math.sqrt(D)
    wqkv_s = wqkv.at[:, :F].multiply(scale)        # fold 1/sqrt(D) into Q columns
    wo_fused = wo_proj @ wo_lin                    # fuse the two output projections
    wgu = jnp.concatenate([wg, wu], axis=1)        # (F, 2*FF)
    return (prenorm_w, wqkv_s, wo_fused, bo_lin, postnorm_w, wgu, wd)


# ---------------------------------------------------------------------------
# pure-JAX reference (mirrors the PyTorch forward) for a correctness check
# ---------------------------------------------------------------------------
def reference(x, module_params):
    (prenorm_w, wqkv, wo_proj, wo_lin, bo_lin, postnorm_w, wg, wu, wd) = module_params

    def rmsnorm(v, w):
        ms = jnp.mean(v * v, axis=-1, keepdims=True)
        return (v * jax.lax.rsqrt(ms + EPS)) * w

    h = rmsnorm(x, prenorm_w)                                    # (B,S,F)
    qkv = h @ wqkv                                               # (B,S,3F)
    q, k, v = jnp.split(qkv, 3, axis=-1)
    q = q.reshape(B, S, H, D).transpose(0, 2, 1, 3) / math.sqrt(D)
    k = k.reshape(B, S, H, D).transpose(0, 2, 1, 3)
    v = v.reshape(B, S, H, D).transpose(0, 2, 1, 3)
    s = jnp.einsum("bhqd,bhkd->bhqk", q, k)
    p = jax.nn.softmax(s, axis=-1)
    o = jnp.einsum("bhqk,bhkd->bhqd", p, v).transpose(0, 2, 1, 3).reshape(B, S, F)
    attn = (o @ wo_proj) @ wo_lin + bo_lin
    x1 = attn + x
    h2 = rmsnorm(x1, postnorm_w)
    g = h2 @ wg
    u = h2 @ wu
    m = ((g * jax.nn.sigmoid(g)) * u) @ wd
    return m + x1


# ---------------------------------------------------------------------------
# deterministic parameter init (synthetic; shapes match the nn.Module)
# ---------------------------------------------------------------------------
def init_module_params(key):
    keys = jax.random.split(key, 8)
    scale = 0.05
    prenorm_w = jnp.ones((1, F), jnp.float32)
    postnorm_w = jnp.ones((1, F), jnp.float32)
    wqkv = scale * jax.random.normal(keys[0], (F, 3 * F), jnp.float32)   # in_proj_weight.T
    wo_proj = scale * jax.random.normal(keys[1], (F, F), jnp.float32)    # MHA out_proj.weight.T
    wo_lin = scale * jax.random.normal(keys[2], (F, F), jnp.float32)     # Attention.out.weight.T
    bo_lin = scale * jax.random.normal(keys[3], (1, F), jnp.float32)     # Attention.out.bias
    wg = scale * jax.random.normal(keys[4], (F, FF), jnp.float32)        # gate.weight.T
    wu = scale * jax.random.normal(keys[5], (F, FF), jnp.float32)        # up.weight.T
    wd = scale * jax.random.normal(keys[6], (FF, F), jnp.float32)        # down.weight.T
    return (prenorm_w, wqkv, wo_proj, wo_lin, bo_lin, postnorm_w, wg, wu, wd)


if __name__ == "__main__":
    key = jax.random.PRNGKey(0)
    kx, kp = jax.random.split(key)
    x = jax.random.normal(kx, (B, S, F), jnp.float32)

    module_params = init_module_params(kp)
    kernel_params = prepare_kernel_params(module_params)

    out = jax.block_until_ready(transformer_block(x, kernel_params))
    ref = jax.block_until_ready(reference(x, module_params))

    assert out.shape == (B, S, F)
    err = float(jnp.max(jnp.abs(out - ref)))
    # slightly looser than 1e-4 to cover the approximate-reciprocal softmax
    assert err < 5e-3, f"mismatch vs pure-JAX reference (max abs err {err})"

    print("KERNEL_OK")
</pallas_src>

<mosaic_0001>
module attributes {stable_mosaic.version = 11 : i64} {
  func.func @transformer_kernel(%arg0: i32, %arg1: memref<2x8x64xf32, #tpu.memory_space<vmem>>, %arg2: memref<1x64xf32, #tpu.memory_space<vmem>>, %arg3: memref<64x192xf32, #tpu.memory_space<vmem>>, %arg4: memref<64x64xf32, #tpu.memory_space<vmem>>, %arg5: memref<1x64xf32, #tpu.memory_space<vmem>>, %arg6: memref<1x64xf32, #tpu.memory_space<vmem>>, %arg7: memref<64x512xf32, #tpu.memory_space<vmem>>, %arg8: memref<256x64xf32, #tpu.memory_space<vmem>>, %arg9: memref<2x8x64xf32, #tpu.memory_space<vmem>>) attributes {dimension_semantics = [#tpu.dimension_semantics<parallel>], iteration_bounds = array<i64: 1>, scalar_prefetch = 0 : i64, scratch_operands = 0 : i64, tpu.core_type = #tpu.core_type<tc>, window_params = [{transform_indices = @transform_0, window_bounds = array<i64: 2, 8, 64>}, {pipeline_mode = #tpu.pipeline_mode<synchronous>, transform_indices = @transform_1, window_bounds = array<i64: 1, 64>}, {pipeline_mode = #tpu.pipeline_mode<synchronous>, transform_indices = @transform_2, window_bounds = array<i64: 64, 192>}, {pipeline_mode = #tpu.pipeline_mode<synchronous>, transform_indices = @transform_3, window_bounds = array<i64: 64, 64>}, {pipeline_mode = #tpu.pipeline_mode<synchronous>, transform_indices = @transform_4, window_bounds = array<i64: 1, 64>}, {pipeline_mode = #tpu.pipeline_mode<synchronous>, transform_indices = @transform_5, window_bounds = array<i64: 1, 64>}, {pipeline_mode = #tpu.pipeline_mode<synchronous>, transform_indices = @transform_6, window_bounds = array<i64: 64, 512>}, {pipeline_mode = #tpu.pipeline_mode<synchronous>, transform_indices = @transform_7, window_bounds = array<i64: 256, 64>}, {transform_indices = @transform_8, window_bounds = array<i64: 2, 8, 64>}]} {
    %c0 = arith.constant 0 : index
    %c0_0 = arith.constant 0 : index
    %c0_1 = arith.constant 0 : index
    %0 = vector.load %arg1[%c0, %c0_0, %c0_1] : memref<2x8x64xf32, #tpu.memory_space<vmem>>, vector<2x8x64xf32>
    %1 = vector.shape_cast %0 : vector<2x8x64xf32> to vector<16x64xf32>
    %c0_2 = arith.constant 0 : index
    %c0_3 = arith.constant 0 : index
    %2 = vector.load %arg2[%c0_2, %c0_3] : memref<1x64xf32, #tpu.memory_space<vmem>>, vector<1x64xf32>
    %3 = arith.mulf %1, %1 : vector<16x64xf32>
    %cst = arith.constant dense<0.000000e+00> : vector<16xf32>
    %4 = vector.multi_reduction <add>, %3, %cst [1] : vector<16x64xf32> to vector<16xf32>
    %5 = vector.shape_cast %4 : vector<16xf32> to vector<16x1xf32>
    %cst_4 = arith.constant 6.400000e+01 : f32
    %6 = vector.broadcast %cst_4 : f32 to vector<16x1xf32>
    %7 = arith.divf %5, %6 : vector<16x1xf32>
    %cst_5 = arith.constant 9.99999997E-7 : f32
    %8 = vector.broadcast %cst_5 : f32 to vector<16x1xf32>
    %9 = arith.addf %7, %8 : vector<16x1xf32>
    %10 = math.rsqrt %9 : vector<16x1xf32>
    %11 = vector.broadcast %10 : vector<16x1xf32> to vector<16x64xf32>
    %12 = arith.mulf %1, %11 : vector<16x64xf32>
    %13 = vector.broadcast %2 : vector<1x64xf32> to vector<16x64xf32>
    %14 = arith.mulf %12, %13 : vector<16x64xf32>
    %c0_6 = arith.constant 0 : index
    %c0_7 = arith.constant 0 : index
    %15 = vector.load %arg3[%c0_6, %c0_7] : memref<64x192xf32, #tpu.memory_space<vmem>>, vector<64x192xf32>
    %cst_8 = arith.constant dense<0.000000e+00> : vector<16x192xf32>
    %16 = tpu.matmul %14, %15, %cst_8 {dimension_numbers = #tpu.dot_dimension_numbers<[1], [0], [0], [1], [0, 0, 1, 1], [], []>} : vector<16x64xf32>, vector<64x192xf32>, vector<16x192xf32> -> vector<16x192xf32>
    %17 = vector.extract_strided_slice %16 {offsets = [0, 0], sizes = [8, 16], strides = [1, 1]} : vector<16x192xf32> to vector<8x16xf32>
    %18 = vector.extract_strided_slice %16 {offsets = [0, 64], sizes = [8, 16], strides = [1, 1]} : vector<16x192xf32> to vector<8x16xf32>
    %19 = vector.extract_strided_slice %16 {offsets = [0, 128], sizes = [8, 16], strides = [1, 1]} : vector<16x192xf32> to vector<8x16xf32>
    %20 = tpu.transpose %18, [1, 0] : vector<8x16xf32> -> vector<16x8xf32>
    %cst_9 = arith.constant dense<0.000000e+00> : vector<8x8xf32>
    %21 = tpu.matmul %17, %20, %cst_9 {dimension_numbers = #tpu.dot_dimension_numbers<[1], [0], [0], [1], [0, 0, 1, 1], [], []>} : vector<8x16xf32>, vector<16x8xf32>, vector<8x8xf32> -> vector<8x8xf32>
    %cst_10 = arith.constant dense<0xFF800000> : vector<8xf32>
    %22 = vector.multi_reduction <maximumf>, %21, %cst_10 [1] : vector<8x8xf32> to vector<8xf32>
    %23 = vector.shape_cast %22 : vector<8xf32> to vector<8x1xf32>
    %24 = vector.broadcast %23 : vector<8x1xf32> to vector<8x8xf32>
    %25 = arith.subf %21, %24 : vector<8x8xf32>
    %26 = math.exp %25 : vector<8x8xf32>
    %cst_11 = arith.constant dense<0.000000e+00> : vector<8xf32>
    %27 = vector.multi_reduction <add>, %26, %cst_11 [1] : vector<8x8xf32> to vector<8xf32>
    %28 = vector.shape_cast %27 : vector<8xf32> to vector<8x1xf32>
    %29 = tpu.reciprocal %28 {approx = true} : vector<8x1xf32> -> vector<8x1xf32>
    %30 = vector.broadcast %29 : vector<8x1xf32> to vector<8x8xf32>
    %31 = arith.mulf %26, %30 : vector<8x8xf32>
    %cst_12 = arith.constant dense<0.000000e+00> : vector<8x16xf32>
    %32 = tpu.matmul %31, %19, %cst_12 {dimension_numbers = #tpu.dot_dimension_numbers<[1], [0], [0], [1], [0, 0, 1, 1], [], []>} : vector<8x8xf32>, vector<8x16xf32>, vector<8x16xf32> -> vector<8x16xf32>
    %c0_13 = arith.constant 0 : index
    %c0_14 = arith.constant 0 : index
    %33 = vector.load %arg4[%c0_13, %c0_14] : memref<64x64xf32, #tpu.memory_space<vmem>>, vector<16x64xf32>
    %cst_15 = arith.constant dense<0.000000e+00> : vector<8x64xf32>
    %34 = tpu.matmul %32, %33, %cst_15 {dimension_numbers = #tpu.dot_dimension_numbers<[1], [0], [0], [1], [0, 0, 1, 1], [], []>} : vector<8x16xf32>, vector<16x64xf32>, vector<8x64xf32> -> vector<8x64xf32>
    %35 = vector.extract_strided_slice %16 {offsets = [0, 16], sizes = [8, 16], strides = [1, 1]} : vector<16x192xf32> to vector<8x16xf32>
    %36 = vector.extract_strided_slice %16 {offsets = [0, 80], sizes = [8, 16], strides = [1, 1]} : vector<16x192xf32> to vector<8x16xf32>
    %37 = vector.extract_strided_slice %16 {offsets = [0, 144], sizes = [8, 16], strides = [1, 1]} : vector<16x192xf32> to vector<8x16xf32>
    %38 = tpu.transpose %36, [1, 0] : vector<8x16xf32> -> vector<16x8xf32>
    %cst_16 = arith.constant dense<0.000000e+00> : vector<8x8xf32>
    %39 = tpu.matmul %35, %38, %cst_16 {dimension_numbers = #tpu.dot_dimension_numbers<[1], [0], [0], [1], [0, 0, 1, 1], [], []>} : vector<8x16xf32>, vector<16x8xf32>, vector<8x8xf32> -> vector<8x8xf32>
    %cst_17 = arith.constant dense<0xFF800000> : vector<8xf32>
    %40 = vector.multi_reduction <maximumf>, %39, %cst_17 [1] : vector<8x8xf32> to vector<8xf32>
    %41 = vector.shape_cast %40 : vector<8xf32> to vector<8x1xf32>
    %42 = vector.broadcast %41 : vector<8x1xf32> to vector<8x8xf32>
    %43 = arith.subf %39, %42 : vector<8x8xf32>
    %44 = math.exp %43 : vector<8x8xf32>
    %cst_18 = arith.constant dense<0.000000e+00> : vector<8xf32>
    %45 = vector.multi_reduction <add>, %44, %cst_18 [1] : vector<8x8xf32> to vector<8xf32>
    %46 = vector.shape_cast %45 : vector<8xf32> to vector<8x1xf32>
    %47 = tpu.reciprocal %46 {approx = true} : vector<8x1xf32> -> vector<8x1xf32>
    %48 = vector.broadcast %47 : vector<8x1xf32> to vector<8x8xf32>
    %49 = arith.mulf %44, %48 : vector<8x8xf32>
    %cst_19 = arith.constant dense<0.000000e+00> : vector<8x16xf32>
    %50 = tpu.matmul %49, %37, %cst_19 {dimension_numbers = #tpu.dot_dimension_numbers<[1], [0], [0], [1], [0, 0, 1, 1], [], []>} : vector<8x8xf32>, vector<8x16xf32>, vector<8x16xf32> -> vector<8x16xf32>
    %c16 = arith.constant 16 : index
    %c0_20 = arith.constant 0 : index
    %51 = vector.load %arg4[%c16, %c0_20] : memref<64x64xf32, #tpu.memory_space<vmem>>, vector<16x64xf32>
    %cst_21 = arith.constant dense<0.000000e+00> : vector<8x64xf32>
    %52 = tpu.matmul %50, %51, %cst_21 {dimension_numbers = #tpu.dot_dimension_numbers<[1], [0], [0], [1], [0, 0, 1, 1], [], []>} : vector<8x16xf32>, vector<16x64xf32>, vector<8x64xf32> -> vector<8x64xf32>
    %53 = arith.addf %34, %52 : vector<8x64xf32>
    %54 = vector.extract_strided_slice %16 {offsets = [0, 32], sizes = [8, 16], strides = [1, 1]} : vector<16x192xf32> to vector<8x16xf32>
    %55 = vector.extract_strided_slice %16 {offsets = [0, 96], sizes = [8, 16], strides = [1, 1]} : vector<16x192xf32> to vector<8x16xf32>
    %56 = vector.extract_strided_slice %16 {offsets = [0, 160], sizes = [8, 16], strides = [1, 1]} : vector<16x192xf32> to vector<8x16xf32>
    %57 = tpu.transpose %55, [1, 0] : vector<8x16xf32> -> vector<16x8xf32>
    %cst_22 = arith.constant dense<0.000000e+00> : vector<8x8xf32>
    %58 = tpu.matmul %54, %57, %cst_22 {dimension_numbers = #tpu.dot_dimension_numbers<[1], [0], [0], [1], [0, 0, 1, 1], [], []>} : vector<8x16xf32>, vector<16x8xf32>, vector<8x8xf32> -> vector<8x8xf32>
    %cst_23 = arith.constant dense<0xFF800000> : vector<8xf32>
    %59 = vector.multi_reduction <maximumf>, %58, %cst_23 [1] : vector<8x8xf32> to vector<8xf32>
    %60 = vector.shape_cast %59 : vector<8xf32> to vector<8x1xf32>
    %61 = vector.broadcast %60 : vector<8x1xf32> to vector<8x8xf32>
    %62 = arith.subf %58, %61 : vector<8x8xf32>
    %63 = math.exp %62 : vector<8x8xf32>
    %cst_24 = arith.constant dense<0.000000e+00> : vector<8xf32>
    %64 = vector.multi_reduction <add>, %63, %cst_24 [1] : vector<8x8xf32> to vector<8xf32>
    %65 = vector.shape_cast %64 : vector<8xf32> to vector<8x1xf32>
    %66 = tpu.reciprocal %65 {approx = true} : vector<8x1xf32> -> vector<8x1xf32>
    %67 = vector.broadcast %66 : vector<8x1xf32> to vector<8x8xf32>
    %68 = arith.mulf %63, %67 : vector<8x8xf32>
    %cst_25 = arith.constant dense<0.000000e+00> : vector<8x16xf32>
    %69 = tpu.matmul %68, %56, %cst_25 {dimension_numbers = #tpu.dot_dimension_numbers<[1], [0], [0], [1], [0, 0, 1, 1], [], []>} : vector<8x8xf32>, vector<8x16xf32>, vector<8x16xf32> -> vector<8x16xf32>
    %c32 = arith.constant 32 : index
    %c0_26 = arith.constant 0 : index
    %70 = vector.load %arg4[%c32, %c0_26] : memref<64x64xf32, #tpu.memory_space<vmem>>, vector<16x64xf32>
    %cst_27 = arith.constant dense<0.000000e+00> : vector<8x64xf32>
    %71 = tpu.matmul %69, %70, %cst_27 {dimension_numbers = #tpu.dot_dimension_numbers<[1], [0], [0], [1], [0, 0, 1, 1], [], []>} : vector<8x16xf32>, vector<16x64xf32>, vector<8x64xf32> -> vector<8x64xf32>
    %72 = arith.addf %53, %71 : vector<8x64xf32>
    %73 = vector.extract_strided_slice %16 {offsets = [0, 48], sizes = [8, 16], strides = [1, 1]} : vector<16x192xf32> to vector<8x16xf32>
    %74 = vector.extract_strided_slice %16 {offsets = [0, 112], sizes = [8, 16], strides = [1, 1]} : vector<16x192xf32> to vector<8x16xf32>
    %75 = vector.extract_strided_slice %16 {offsets = [0, 176], sizes = [8, 16], strides = [1, 1]} : vector<16x192xf32> to vector<8x16xf32>
    %76 = tpu.transpose %74, [1, 0] : vector<8x16xf32> -> vector<16x8xf32>
    %cst_28 = arith.constant dense<0.000000e+00> : vector<8x8xf32>
    %77 = tpu.matmul %73, %76, %cst_28 {dimension_numbers = #tpu.dot_dimension_numbers<[1], [0], [0], [1], [0, 0, 1, 1], [], []>} : vector<8x16xf32>, vector<16x8xf32>, vector<8x8xf32> -> vector<8x8xf32>
    %cst_29 = arith.constant dense<0xFF800000> : vector<8xf32>
    %78 = vector.multi_reduction <maximumf>, %77, %cst_29 [1] : vector<8x8xf32> to vector<8xf32>
    %79 = vector.shape_cast %78 : vector<8xf32> to vector<8x1xf32>
    %80 = vector.broadcast %79 : vector<8x1xf32> to vector<8x8xf32>
    %81 = arith.subf %77, %80 : vector<8x8xf32>
    %82 = math.exp %81 : vector<8x8xf32>
    %cst_30 = arith.constant dense<0.000000e+00> : vector<8xf32>
    %83 = vector.multi_reduction <add>, %82, %cst_30 [1] : vector<8x8xf32> to vector<8xf32>
    %84 = vector.shape_cast %83 : vector<8xf32> to vector<8x1xf32>
    %85 = tpu.reciprocal %84 {approx = true} : vector<8x1xf32> -> vector<8x1xf32>
    %86 = vector.broadcast %85 : vector<8x1xf32> to vector<8x8xf32>
    %87 = arith.mulf %82, %86 : vector<8x8xf32>
    %cst_31 = arith.constant dense<0.000000e+00> : vector<8x16xf32>
    %88 = tpu.matmul %87, %75, %cst_31 {dimension_numbers = #tpu.dot_dimension_numbers<[1], [0], [0], [1], [0, 0, 1, 1], [], []>} : vector<8x8xf32>, vector<8x16xf32>, vector<8x16xf32> -> vector<8x16xf32>
    %c48 = arith.constant 48 : index
    %c0_32 = arith.constant 0 : index
    %89 = vector.load %arg4[%c48, %c0_32] : memref<64x64xf32, #tpu.memory_space<vmem>>, vector<16x64xf32>
    %cst_33 = arith.constant dense<0.000000e+00> : vector<8x64xf32>
    %90 = tpu.matmul %88, %89, %cst_33 {dimension_numbers = #tpu.dot_dimension_numbers<[1], [0], [0], [1], [0, 0, 1, 1], [], []>} : vector<8x16xf32>, vector<16x64xf32>, vector<8x64xf32> -> vector<8x64xf32>
    %91 = arith.addf %72, %90 : vector<8x64xf32>
    %92 = vector.extract_strided_slice %16 {offsets = [8, 0], sizes = [8, 16], strides = [1, 1]} : vector<16x192xf32> to vector<8x16xf32>
    %93 = vector.extract_strided_slice %16 {offsets = [8, 64], sizes = [8, 16], strides = [1, 1]} : vector<16x192xf32> to vector<8x16xf32>
    %94 = vector.extract_strided_slice %16 {offsets = [8, 128], sizes = [8, 16], strides = [1, 1]} : vector<16x192xf32> to vector<8x16xf32>
    %95 = tpu.transpose %93, [1, 0] : vector<8x16xf32> -> vector<16x8xf32>
    %cst_34 = arith.constant dense<0.000000e+00> : vector<8x8xf32>
    %96 = tpu.matmul %92, %95, %cst_34 {dimension_numbers = #tpu.dot_dimension_numbers<[1], [0], [0], [1], [0, 0, 1, 1], [], []>} : vector<8x16xf32>, vector<16x8xf32>, vector<8x8xf32> -> vector<8x8xf32>
    %cst_35 = arith.constant dense<0xFF800000> : vector<8xf32>
    %97 = vector.multi_reduction <maximumf>, %96, %cst_35 [1] : vector<8x8xf32> to vector<8xf32>
    %98 = vector.shape_cast %97 : vector<8xf32> to vector<8x1xf32>
    %99 = vector.broadcast %98 : vector<8x1xf32> to vector<8x8xf32>
    %100 = arith.subf %96, %99 : vector<8x8xf32>
    %101 = math.exp %100 : vector<8x8xf32>
    %cst_36 = arith.constant dense<0.000000e+00> : vector<8xf32>
    %102 = vector.multi_reduction <add>, %101, %cst_36 [1] : vector<8x8xf32> to vector<8xf32>
    %103 = vector.shape_cast %102 : vector<8xf32> to vector<8x1xf32>
    %104 = tpu.reciprocal %103 {approx = true} : vector<8x1xf32> -> vector<8x1xf32>
    %105 = vector.broadcast %104 : vector<8x1xf32> to vector<8x8xf32>
    %106 = arith.mulf %101, %105 : vector<8x8xf32>
    %cst_37 = arith.constant dense<0.000000e+00> : vector<8x16xf32>
    %107 = tpu.matmul %106, %94, %cst_37 {dimension_numbers = #tpu.dot_dimension_numbers<[1], [0], [0], [1], [0, 0, 1, 1], [], []>} : vector<8x8xf32>, vector<8x16xf32>, vector<8x16xf32> -> vector<8x16xf32>
    %c0_38 = arith.constant 0 : index
    %c0_39 = arith.constant 0 : index
    %108 = vector.load %arg4[%c0_38, %c0_39] : memref<64x64xf32, #tpu.memory_space<vmem>>, vector<16x64xf32>
    %cst_40 = arith.constant dense<0.000000e+00> : vector<8x64xf32>
    %109 = tpu.matmul %107, %108, %cst_40 {dimension_numbers = #tpu.dot_dimension_numbers<[1], [0], [0], [1], [0, 0, 1, 1], [], []>} : vector<8x16xf32>, vector<16x64xf32>, vector<8x64xf32> -> vector<8x64xf32>
    %110 = vector.extract_strided_slice %16 {offsets = [8, 16], sizes = [8, 16], strides = [1, 1]} : vector<16x192xf32> to vector<8x16xf32>
    %111 = vector.extract_strided_slice %16 {offsets = [8, 80], sizes = [8, 16], strides = [1, 1]} : vector<16x192xf32> to vector<8x16xf32>
    %112 = vector.extract_strided_slice %16 {offsets = [8, 144], sizes = [8, 16], strides = [1, 1]} : vector<16x192xf32> to vector<8x16xf32>
    %113 = tpu.transpose %111, [1, 0] : vector<8x16xf32> -> vector<16x8xf32>
    %cst_41 = arith.constant dense<0.000000e+00> : vector<8x8xf32>
    %114 = tpu.matmul %110, %113, %cst_41 {dimension_numbers = #tpu.dot_dimension_numbers<[1], [0], [0], [1], [0, 0, 1, 1], [], []>} : vector<8x16xf32>, vector<16x8xf32>, vector<8x8xf32> -> vector<8x8xf32>
    %cst_42 = arith.constant dense<0xFF800000> : vector<8xf32>
    %115 = vector.multi_reduction <maximumf>, %114, %cst_42 [1] : vector<8x8xf32> to vector<8xf32>
    %116 = vector.shape_cast %115 : vector<8xf32> to vector<8x1xf32>
    %117 = vector.broadcast %116 : vector<8x1xf32> to vector<8x8xf32>
    %118 = arith.subf %114, %117 : vector<8x8xf32>
    %119 = math.exp %118 : vector<8x8xf32>
    %cst_43 = arith.constant dense<0.000000e+00> : vector<8xf32>
    %120 = vector.multi_reduction <add>, %119, %cst_43 [1] : vector<8x8xf32> to vector<8xf32>
    %121 = vector.shape_cast %120 : vector<8xf32> to vector<8x1xf32>
    %122 = tpu.reciprocal %121 {approx = true} : vector<8x1xf32> -> vector<8x1xf32>
    %123 = vector.broadcast %122 : vector<8x1xf32> to vector<8x8xf32>
    %124 = arith.mulf %119, %123 : vector<8x8xf32>
    %cst_44 = arith.constant dense<0.000000e+00> : vector<8x16xf32>
    %125 = tpu.matmul %124, %112, %cst_44 {dimension_numbers = #tpu.dot_dimension_numbers<[1], [0], [0], [1], [0, 0, 1, 1], [], []>} : vector<8x8xf32>, vector<8x16xf32>, vector<8x16xf32> -> vector<8x16xf32>
    %c16_45 = arith.constant 16 : index
    %c0_46 = arith.constant 0 : index
    %126 = vector.load %arg4[%c16_45, %c0_46] : memref<64x64xf32, #tpu.memory_space<vmem>>, vector<16x64xf32>
    %cst_47 = arith.constant dense<0.000000e+00> : vector<8x64xf32>
    %127 = tpu.matmul %125, %126, %cst_47 {dimension_numbers = #tpu.dot_dimension_numbers<[1], [0], [0], [1], [0, 0, 1, 1], [], []>} : vector<8x16xf32>, vector<16x64xf32>, vector<8x64xf32> -> vector<8x64xf32>
    %128 = arith.addf %109, %127 : vector<8x64xf32>
    %129 = vector.extract_strided_slice %16 {offsets = [8, 32], sizes = [8, 16], strides = [1, 1]} : vector<16x192xf32> to vector<8x16xf32>
    %130 = vector.extract_strided_slice %16 {offsets = [8, 96], sizes = [8, 16], strides = [1, 1]} : vector<16x192xf32> to vector<8x16xf32>
    %131 = vector.extract_strided_slice %16 {offsets = [8, 160], sizes = [8, 16], strides = [1, 1]} : vector<16x192xf32> to vector<8x16xf32>
    %132 = tpu.transpose %130, [1, 0] : vector<8x16xf32> -> vector<16x8xf32>
    %cst_48 = arith.constant dense<0.000000e+00> : vector<8x8xf32>
    %133 = tpu.matmul %129, %132, %cst_48 {dimension_numbers = #tpu.dot_dimension_numbers<[1], [0], [0], [1], [0, 0, 1, 1], [], []>} : vector<8x16xf32>, vector<16x8xf32>, vector<8x8xf32> -> vector<8x8xf32>
    %cst_49 = arith.constant dense<0xFF800000> : vector<8xf32>
    %134 = vector.multi_reduction <maximumf>, %133, %cst_49 [1] : vector<8x8xf32> to vector<8xf32>
    %135 = vector.shape_cast %134 : vector<8xf32> to vector<8x1xf32>
    %136 = vector.broadcast %135 : vector<8x1xf32> to vector<8x8xf32>
    %137 = arith.subf %133, %136 : vector<8x8xf32>
    %138 = math.exp %137 : vector<8x8xf32>
    %cst_50 = arith.constant dense<0.000000e+00> : vector<8xf32>
    %139 = vector.multi_reduction <add>, %138, %cst_50 [1] : vector<8x8xf32> to vector<8xf32>
    %140 = vector.shape_cast %139 : vector<8xf32> to vector<8x1xf32>
    %141 = tpu.reciprocal %140 {approx = true} : vector<8x1xf32> -> vector<8x1xf32>
    %142 = vector.broadcast %141 : vector<8x1xf32> to vector<8x8xf32>
    %143 = arith.mulf %138, %142 : vector<8x8xf32>
    %cst_51 = arith.constant dense<0.000000e+00> : vector<8x16xf32>
    %144 = tpu.matmul %143, %131, %cst_51 {dimension_numbers = #tpu.dot_dimension_numbers<[1], [0], [0], [1], [0, 0, 1, 1], [], []>} : vector<8x8xf32>, vector<8x16xf32>, vector<8x16xf32> -> vector<8x16xf32>
    %c32_52 = arith.constant 32 : index
    %c0_53 = arith.constant 0 : index
    %145 = vector.load %arg4[%c32_52, %c0_53] : memref<64x64xf32, #tpu.memory_space<vmem>>, vector<16x64xf32>
    %cst_54 = arith.constant dense<0.000000e+00> : vector<8x64xf32>
    %146 = tpu.matmul %144, %145, %cst_54 {dimension_numbers = #tpu.dot_dimension_numbers<[1], [0], [0], [1], [0, 0, 1, 1], [], []>} : vector<8x16xf32>, vector<16x64xf32>, vector<8x64xf32> -> vector<8x64xf32>
    %147 = arith.addf %128, %146 : vector<8x64xf32>
    %148 = vector.extract_strided_slice %16 {offsets = [8, 48], sizes = [8, 16], strides = [1, 1]} : vector<16x192xf32> to vector<8x16xf32>
    %149 = vector.extract_strided_slice %16 {offsets = [8, 112], sizes = [8, 16], strides = [1, 1]} : vector<16x192xf32> to vector<8x16xf32>
    %150 = vector.extract_strided_slice %16 {offsets = [8, 176], sizes = [8, 16], strides = [1, 1]} : vector<16x192xf32> to vector<8x16xf32>
    %151 = tpu.transpose %149, [1, 0] : vector<8x16xf32> -> vector<16x8xf32>
    %cst_55 = arith.constant dense<0.000000e+00> : vector<8x8xf32>
    %152 = tpu.matmul %148, %151, %cst_55 {dimension_numbers = #tpu.dot_dimension_numbers<[1], [0], [0], [1], [0, 0, 1, 1], [], []>} : vector<8x16xf32>, vector<16x8xf32>, vector<8x8xf32> -> vector<8x8xf32>
    %cst_56 = arith.constant dense<0xFF800000> : vector<8xf32>
    %153 = vector.multi_reduction <maximumf>, %152, %cst_56 [1] : vector<8x8xf32> to vector<8xf32>
    %154 = vector.shape_cast %153 : vector<8xf32> to vector<8x1xf32>
    %155 = vector.broadcast %154 : vector<8x1xf32> to vector<8x8xf32>
    %156 = arith.subf %152, %155 : vector<8x8xf32>
    %157 = math.exp %156 : vector<8x8xf32>
    %cst_57 = arith.constant dense<0.000000e+00> : vector<8xf32>
    %158 = vector.multi_reduction <add>, %157, %cst_57 [1] : vector<8x8xf32> to vector<8xf32>
    %159 = vector.shape_cast %158 : vector<8xf32> to vector<8x1xf32>
    %160 = tpu.reciprocal %159 {approx = true} : vector<8x1xf32> -> vector<8x1xf32>
    %161 = vector.broadcast %160 : vector<8x1xf32> to vector<8x8xf32>
    %162 = arith.mulf %157, %161 : vector<8x8xf32>
    %cst_58 = arith.constant dense<0.000000e+00> : vector<8x16xf32>
    %163 = tpu.matmul %162, %150, %cst_58 {dimension_numbers = #tpu.dot_dimension_numbers<[1], [0], [0], [1], [0, 0, 1, 1], [], []>} : vector<8x8xf32>, vector<8x16xf32>, vector<8x16xf32> -> vector<8x16xf32>
    %c48_59 = arith.constant 48 : index
    %c0_60 = arith.constant 0 : index
    %164 = vector.load %arg4[%c48_59, %c0_60] : memref<64x64xf32, #tpu.memory_space<vmem>>, vector<16x64xf32>
    %cst_61 = arith.constant dense<0.000000e+00> : vector<8x64xf32>
    %165 = tpu.matmul %163, %164, %cst_61 {dimension_numbers = #tpu.dot_dimension_numbers<[1], [0], [0], [1], [0, 0, 1, 1], [], []>} : vector<8x16xf32>, vector<16x64xf32>, vector<8x64xf32> -> vector<8x64xf32>
    %166 = arith.addf %147, %165 : vector<8x64xf32>
    %167 = tpu.concatenate %91, %166 in 0 : vector<8x64xf32>, vector<8x64xf32> -> vector<16x64xf32>
    %c0_62 = arith.constant 0 : index
    %c0_63 = arith.constant 0 : index
    %168 = vector.load %arg5[%c0_62, %c0_63] : memref<1x64xf32, #tpu.memory_space<vmem>>, vector<1x64xf32>
    %169 = vector.broadcast %168 : vector<1x64xf32> to vector<16x64xf32>
    %170 = arith.addf %167, %169 : vector<16x64xf32>
    %171 = arith.addf %170, %1 : vector<16x64xf32>
    %c0_64 = arith.constant 0 : index
    %c0_65 = arith.constant 0 : index
    %172 = vector.load %arg6[%c0_64, %c0_65] : memref<1x64xf32, #tpu.memory_space<vmem>>, vector<1x64xf32>
    %173 = arith.mulf %171, %171 : vector<16x64xf32>
    %cst_66 = arith.constant dense<0.000000e+00> : vector<16xf32>
    %174 = vector.multi_reduction <add>, %173, %cst_66 [1] : vector<16x64xf32> to vector<16xf32>
    %175 = vector.shape_cast %174 : vector<16xf32> to vector<16x1xf32>
    %cst_67 = arith.constant 6.400000e+01 : f32
    %176 = vector.broadcast %cst_67 : f32 to vector<16x1xf32>
    %177 = arith.divf %175, %176 : vector<16x1xf32>
    %cst_68 = arith.constant 9.99999997E-7 : f32
    %178 = vector.broadcast %cst_68 : f32 to vector<16x1xf32>
    %179 = arith.addf %177, %178 : vector<16x1xf32>
    %180 = math.rsqrt %179 : vector<16x1xf32>
    %181 = vector.broadcast %180 : vector<16x1xf32> to vector<16x64xf32>
    %182 = arith.mulf %171, %181 : vector<16x64xf32>
    %183 = vector.broadcast %172 : vector<1x64xf32> to vector<16x64xf32>
    %184 = arith.mulf %182, %183 : vector<16x64xf32>
    %c0_69 = arith.constant 0 : index
    %c0_70 = arith.constant 0 : index
    %185 = vector.load %arg7[%c0_69, %c0_70] : memref<64x512xf32, #tpu.memory_space<vmem>>, vector<64x512xf32>
    %cst_71 = arith.constant dense<0.000000e+00> : vector<16x512xf32>
    %186 = tpu.matmul %184, %185, %cst_71 {dimension_numbers = #tpu.dot_dimension_numbers<[1], [0], [0], [1], [0, 0, 1, 1], [], []>} : vector<16x64xf32>, vector<64x512xf32>, vector<16x512xf32> -> vector<16x512xf32>
    %187 = vector.extract_strided_slice %186 {offsets = [0, 0], sizes = [16, 256], strides = [1, 1]} : vector<16x512xf32> to vector<16x256xf32>
    %188 = vector.extract_strided_slice %186 {offsets = [0, 256], sizes = [16, 256], strides = [1, 1]} : vector<16x512xf32> to vector<16x256xf32>
    %189 = arith.negf %187 : vector<16x256xf32>
    %190 = math.exp %189 : vector<16x256xf32>
    %cst_72 = arith.constant 1.000000e+00 : f32
    %191 = vector.broadcast %cst_72 : f32 to vector<16x256xf32>
    %192 = arith.addf %191, %190 : vector<16x256xf32>
    %193 = arith.divf %191, %192 : vector<16x256xf32>
    %194 = arith.mulf %187, %193 : vector<16x256xf32>
    %195 = arith.mulf %194, %188 : vector<16x256xf32>
    %c0_73 = arith.constant 0 : index
    %c0_74 = arith.constant 0 : index
    %196 = vector.load %arg8[%c0_73, %c0_74] : memref<256x64xf32, #tpu.memory_space<vmem>>, vector<256x64xf32>
    %cst_75 = arith.constant dense<0.000000e+00> : vector<16x64xf32>
    %197 = tpu.matmul %195, %196, %cst_75 {dimension_numbers = #tpu.dot_dimension_numbers<[1], [0], [0], [1], [0, 0, 1, 1], [], []>} : vector<16x256xf32>, vector<256x64xf32>, vector<16x64xf32> -> vector<16x64xf32>
    %198 = arith.addf %197, %171 : vector<16x64xf32>
    %199 = vector.shape_cast %198 : vector<16x64xf32> to vector<2x8x64xf32>
    %c0_76 = arith.constant 0 : index
    %c0_77 = arith.constant 0 : index
    %c0_78 = arith.constant 0 : index
    %200 = vector.load %arg9[%c0_76, %c0_77, %c0_78] : memref<2x8x64xf32, #tpu.memory_space<vmem>>, vector<2x8x64xf32>
    tpu.vector_store %arg9[%c0_76, %c0_77, %c0_78], %199 {strides = array<i32>} : memref<2x8x64xf32, #tpu.memory_space<vmem>>, vector<2x8x64xf32>,
    return
  }
  func.func @transform_0(%arg0: i32) -> (i32, i32, i32) {
    %c0_i32 = arith.constant 0 : i32
    %c0_i32_0 = arith.constant 0 : i32
    %c0_i32_1 = arith.constant 0 : i32
    return %arg0, %c0_i32, %c0_i32_0 : i32, i32, i32
  }
  func.func @transform_1(%arg0: i32) -> (i32, i32) {
    %c0_i32 = arith.constant 0 : i32
    %c0_i32_0 = arith.constant 0 : i32
    %c0_i32_1 = arith.constant 0 : i32
    return %c0_i32, %c0_i32_0 : i32, i32
  }
  func.func @transform_2(%arg0: i32) -> (i32, i32) {
    %c0_i32 = arith.constant 0 : i32
    %c0_i32_0 = arith.constant 0 : i32
    %c0_i32_1 = arith.constant 0 : i32
    return %c0_i32, %c0_i32_0 : i32, i32
  }
  func.func @transform_3(%arg0: i32) -> (i32, i32) {
    %c0_i32 = arith.constant 0 : i32
    %c0_i32_0 = arith.constant 0 : i32
    %c0_i32_1 = arith.constant 0 : i32
    return %c0_i32, %c0_i32_0 : i32, i32
  }
  func.func @transform_4(%arg0: i32) -> (i32, i32) {
    %c0_i32 = arith.constant 0 : i32
    %c0_i32_0 = arith.constant 0 : i32
    %c0_i32_1 = arith.constant 0 : i32
    return %c0_i32, %c0_i32_0 : i32, i32
  }
  func.func @transform_5(%arg0: i32) -> (i32, i32) {
    %c0_i32 = arith.constant 0 : i32
    %c0_i32_0 = arith.constant 0 : i32
    %c0_i32_1 = arith.constant 0 : i32
    return %c0_i32, %c0_i32_0 : i32, i32
  }
  func.func @transform_6(%arg0: i32) -> (i32, i32) {
    %c0_i32 = arith.constant 0 : i32
    %c0_i32_0 = arith.constant 0 : i32
    %c0_i32_1 = arith.constant 0 : i32
    return %c0_i32, %c0_i32_0 : i32, i32
  }
  func.func @transform_7(%arg0: i32) -> (i32, i32) {
    %c0_i32 = arith.constant 0 : i32
    %c0_i32_0 = arith.constant 0 : i32
    %c0_i32_1 = arith.constant 0 : i32
    return %c0_i32, %c0_i32_0 : i32, i32
  }
  func.func @transform_8(%arg0: i32) -> (i32, i32, i32) {
    %c0_i32 = arith.constant 0 : i32
    %c0_i32_0 = arith.constant 0 : i32
    %c0_i32_1 = arith.constant 0 : i32
    return %arg0, %c0_i32, %c0_i32_0 : i32, i32, i32
  }
}

</mosaic_0001>

<llo_original>
// kernel: tpu_custom_call.1
$region0: #{tpu_custom_call.1}
  #allocation0 [shape = 'u32[]', space=smem, size = 0x4, offset = 0x4, fixed_abs, tag = 'smem constant byte address 0x4 - core index']
  #allocation1 [shape = 'u32[144,128]{1,0:T(1,128)}', space=vmem, size = 0x12000, scoped, tag = 'internal scratch']
  %s0 = inlined_call_operand.hbm [shape: f32[2,8,64], index: 0, kind: input, shape index: {}]
  %s1 = inlined_call_operand.vmem [shape: f32[1,64], index: 1, kind: input, shape index: {}]
  %s2 = inlined_call_operand.vmem [shape: f32[64,192], index: 2, kind: input, shape index: {}]
  %s3 = inlined_call_operand.hbm [shape: f32[64,64], index: 3, kind: input, shape index: {}]
  %s4 = inlined_call_operand.vmem [shape: f32[1,64], index: 4, kind: input, shape index: {}]
  %s5 = inlined_call_operand.vmem [shape: f32[1,64], index: 5, kind: input, shape index: {}]
  %s6 = inlined_call_operand.vmem [shape: f32[64,512], index: 6, kind: input, shape index: {}]
  %s7 = inlined_call_operand.vmem [shape: f32[256,64], index: 7, kind: input, shape index: {}]
  %s8 = inlined_call_operand.hbm [shape: f32[2,8,64], index: 8, kind: output, shape index: {}]
  %s9 = sld [smem:[#allocation0]]
  $region50: #{tpu_custom_call.1} parent=0
    _
  %s11 = ssub.s32 1, %s9
  %s12 = scalar_select 0, %s11, %s9
  $region1: #{tpu_custom_call.1} parent=0
    #allocation2 [shape = 'u8[8192]{0}', space=vmem, size = 0x2000, scoped, tag = 'input window, operand 0, single buffered']
    #allocation3 [shape = 's32[1]{0}', space=sflag, size = 0x4, scoped, tag = 'scoped memory for tpu_custom_call.1']
    #allocation4 [shape = 's32[1]{0}', space=sflag, size = 0x4, scoped, tag = 'scoped memory for tpu_custom_call.1']
    #allocation5 [shape = 'u8[32768]{0}', space=vmem, size = 0x8000, scoped, tag = 'input window, operand 3, single buffered']
    #allocation6 [shape = 's32[1]{0}', space=sflag, size = 0x4, scoped, tag = 'scoped memory for tpu_custom_call.1']
    #allocation7 [shape = 'u8[8192]{0}', space=vmem, size = 0x2000, scoped, tag = 'output window, operand 0, single buffered']
    %13 = vsyncpa [#allocation3], 0
    %14 = vsyncpa [#allocation6], 0
    %15 = vsyncpa [#allocation4], 0
    // Predicated region
    $region2: #{tpu_custom_call.1} parent=1 // pred_check
      _
    $region3: #{tpu_custom_call.1} parent=1 // pred_check_branch
      %17 = sbr.rel (0) target = $region5
    $region4: #{tpu_custom_call.1} parent=1 // pred_region
      %s19 = ssub.s32 256, 256
      %20 = vsyncadd [#allocation3], %s19
      %s21 = sshll.u32 [#allocation2], 4
      %s22 = int_to_ptr.vmem [resolvable:$true] %s21
      %27 = dma.hbm_to_vmem [thread:$0]  %s0, 256, %s22, [#allocation3], 128, 128, 8
    $region5: #{tpu_custom_call.1} parent=1 // pred_fallthru
      _
    // Predicated region
    $region6: #{tpu_custom_call.1} parent=1 // pred_check
      _
    $region7: #{tpu_custom_call.1} parent=1 // pred_check_branch
      %29 = sbr.rel (0) target = $region9
    $region8: #{tpu_custom_call.1} parent=1 // pred_region
      _
    $region9: #{tpu_custom_call.1} parent=1 // pred_fallthru
      _
    // Predicated region
    $region10: #{tpu_custom_call.1} parent=1 // pred_check
      _
    $region11: #{tpu_custom_call.1} parent=1 // pred_check_branch
      %31 = sbr.rel (0) target = $region13
    $region12: #{tpu_custom_call.1} parent=1 // pred_region
      _
    $region13: #{tpu_custom_call.1} parent=1 // pred_fallthru
      _
    // Predicated region
    $region14: #{tpu_custom_call.1} parent=1 // pred_check
      _
    $region15: #{tpu_custom_call.1} parent=1 // pred_check_branch
      %33 = sbr.rel (0) target = $region17
    $region16: #{tpu_custom_call.1} parent=1 // pred_region
      %s35 = ssub.s32 1024, 1024
      %36 = vsyncadd [#allocation6], %s35
      %s37 = sshll.u32 [#allocation5], 4
      %s38 = int_to_ptr.vmem [resolvable:$true] %s37
      %43 = dma.hbm_to_vmem [thread:$0]  %s3, 1024, %s38, [#allocation6], 128, 128, 8
    $region17: #{tpu_custom_call.1} parent=1 // pred_fallthru
      _
    // Predicated region
    $region18: #{tpu_custom_call.1} parent=1 // pred_check
      _
    $region19: #{tpu_custom_call.1} parent=1 // pred_check_branch
      %45 = sbr.rel (0) target = $region21
    $region20: #{tpu_custom_call.1} parent=1 // pred_region
      _
    $region21: #{tpu_custom_call.1} parent=1 // pred_fallthru
      _
    // Predicated region
    $region22: #{tpu_custom_call.1} parent=1 // pred_check
      _
    $region23: #{tpu_custom_call.1} parent=1 // pred_check_branch
      %47 = sbr.rel (0) target = $region25
    $region24: #{tpu_custom_call.1} parent=1 // pred_region
      _
    $region25: #{tpu_custom_call.1} parent=1 // pred_fallthru
      _
    // Predicated region
    $region26: #{tpu_custom_call.1} parent=1 // pred_check
      _
    $region27: #{tpu_custom_call.1} parent=1 // pred_check_branch
      %49 = sbr.rel (0) target = $region29
    $region28: #{tpu_custom_call.1} parent=1 // pred_region
      _
    $region29: #{tpu_custom_call.1} parent=1 // pred_fallthru
      _
    // Predicated region
    $region30: #{tpu_custom_call.1} parent=1 // pred_check
      _
    $region31: #{tpu_custom_call.1} parent=1 // pred_check_branch
      %51 = sbr.rel (0) target = $region33
    $region32: #{tpu_custom_call.1} parent=1 // pred_region
      _
    $region33: #{tpu_custom_call.1} parent=1 // pred_fallthru
      _
    // Predicated region
    $region34: #{tpu_custom_call.1} parent=1 // pred_check
      _
    $region35: #{tpu_custom_call.1} parent=1 // pred_check_branch
      %53 = sbr.rel (0) target = $region37
    $region36: #{tpu_custom_call.1} parent=1 // pred_region
      %54 = dma.done [#allocation3], 256
    $region37: #{tpu_custom_call.1} parent=1 // pred_fallthru
      _
    // Predicated region
    $region38: #{tpu_custom_call.1} parent=1 // pred_check
      _
    $region39: #{tpu_custom_call.1} parent=1 // pred_check_branch
      %56 = sbr.rel (0) target = $region41
    $region40: #{tpu_custom_call.1} parent=1 // pred_region
      %57 = dma.done [#allocation6], 1024
    $region41: #{tpu_custom_call.1} parent=1 // pred_fallthru
      _
    %v58 = vld [vmem:[#allocation2] sm:$0xff]
    %v59 = vld [vmem:[#allocation2 + $0x8] sm:$0xff]
    %v60 = vld [vmem:[%s1] sm:$0x1]
    %v61 = vmul.f32 %v58, %v58
    %v62 = vmul.f32 %v59, %v59
    %vm63 = vcmask 523264
    %v64 = vsel %vm63, %v61, 0.0
    %65 = vadd.xlane.f32.xlu0 %v64
    %v66 = vpop.xlane.xlu0 %65
    %v67 = vsel %vm63, %v62, 0.0
    %68 = vadd.xlane.f32.xlu0 %v67
    %v69 = vpop.xlane.xlu0 %68
    %v70 = vrcp.pop 64.0
    %v71 = vmul.f32 %v66, %v70
    %v72 = vmul.f32 %v69, %v70
    %v73 = vadd.f32 %v71, 1e-06
    %v74 = vadd.f32 %v72, 1e-06
    %v75 = vrsqrt.pop %v73
    %v76 = vrsqrt.pop %v74
    %v77 = vmul.f32 %v58, %v75
    %v78 = vmul.f32 %v59, %v76
    %v80 = vlaneseq
    %v81 = vshrl.u32 %v80, 7
    %v82 = vsub.s32 0, %v81
    %v83 = vrot.slane %v60, %v82
    %v85 = vmul.f32 %v77, %v83
    %v86 = vmul.f32 %v78, %v83
    %v87 = vld [vmem:[%s2] sm:$0xff]
    %v88 = vld [vmem:[%s2 + $0x8] sm:$0xff]
    %v89 = vld [vmem:[%s2 + $0x10] sm:$0xff]
    %v90 = vld [vmem:[%s2 + $0x18] sm:$0xff]
    %v91 = vld [vmem:[%s2 + $0x20] sm:$0xff]
    %v92 = vld [vmem:[%s2 + $0x28] sm:$0xff]
    %v93 = vld [vmem:[%s2 + $0x30] sm:$0xff]
    %v94 = vld [vmem:[%s2 + $0x38] sm:$0xff]
    %v95 = vld [vmem:[%s2 + $0x40] sm:$0xff]
    %v96 = vld [vmem:[%s2 + $0x48] sm:$0xff]
    %v97 = vld [vmem:[%s2 + $0x50] sm:$0xff]
    %v98 = vld [vmem:[%s2 + $0x58] sm:$0xff]
    %v99 = vld [vmem:[%s2 + $0x60] sm:$0xff]
    %v100 = vld [vmem:[%s2 + $0x68] sm:$0xff]
    %v101 = vld [vmem:[%s2 + $0x70] sm:$0xff]
    %v102 = vld [vmem:[%s2 + $0x78] sm:$0xff]
    %v104 = vsel %vm63, %v85, 0
    %v107 = vsel %vm63, %v86, 0
    %109 = vmatprep.subr.mxu0 0.0
    %110 = vmatpush1.msra.mxu0 0.0
    %111 = vmatprep.subr.mxu0 0.0
    %112 = vmatpush1.msra.mxu0 0.0
    %113 = vmatprep.subr.mxu0 0.0
    %114 = vmatpush1.msra.mxu0 0.0
    %115 = vmatprep.subr.mxu0 0.0
    %116 = vmatpush1.msra.mxu0 0.0
    %117 = vmatprep.subr.mxu0 0.0
    %118 = vmatpush1.msra.mxu0 0.0
    %119 = vmatprep.subr.mxu0 0.0
    %120 = vmatpush1.msra.mxu0 0.0
    %121 = vmatprep.subr.mxu0 0.0
    %122 = vmatpush1.msra.mxu0 0.0
    %123 = vmatprep.subr.mxu0 0.0
    %124 = vmatpush1.msra.mxu0 0.0
    %125 = vmatprep.subr.mxu0 %v102
    %126 = vmatpush1.msra.mxu0 %v101
    %127 = vmatprep.subr.mxu0 %v100
    %128 = vmatpush1.msra.mxu0 %v99
    %129 = vmatprep.subr.mxu0 %v98
    %130 = vmatpush1.msra.mxu0 %v97
    %131 = vmatprep.subr.mxu0 %v96
    %132 = vmatpush1.msra.mxu0 %v95
    %133 = vmatprep.subr.mxu0 %v94
    %134 = vmatpush1.msra.mxu0 %v93
    %135 = vmatprep.subr.mxu0 %v92
    %136 = vmatpush1.msra.mxu0 %v91
    %137 = vmatprep.subr.mxu0 %v90
    %138 = vmatpush1.msra.mxu0 %v89
    %139 = vmatprep.subr.mxu0 %v88
    %140 = vmatpush1.msra.mxu0 %v87
    %141 = vmatprep.subr.mxu0 0.0
    %142 = vmatpush2.msra.mxu0 0.0
    %143 = vmatprep.subr.mxu0 0.0
    %144 = vmatpush2.msra.mxu0 0.0
    %145 = vmatprep.subr.mxu0 0.0
    %146 = vmatpush2.msra.mxu0 0.0
    %147 = vmatprep.subr.mxu0 0.0
    %148 = vmatpush2.msra.mxu0 0.0
    %149 = vmatprep.subr.mxu0 0.0
    %150 = vmatpush2.msra.mxu0 0.0
    %151 = vmatprep.subr.mxu0 0.0
    %152 = vmatpush2.msra.mxu0 0.0
    %153 = vmatprep.subr.mxu0 0.0
    %154 = vmatpush2.msra.mxu0 0.0
    %155 = vmatprep.subr.mxu0 0.0
    %156 = vmatpush2.msra.mxu0 0.0
    %157 = vmatprep.subr.mxu0 0.0
    %158 = vmatpush2.msra.mxu0 0.0
    %159 = vmatprep.subr.mxu0 0.0
    %160 = vmatpush2.msra.mxu0 0.0
    %161 = vmatprep.subr.mxu0 0.0
    %162 = vmatpush2.msra.mxu0 0.0
    %163 = vmatprep.subr.mxu0 0.0
    %164 = vmatpush2.msra.mxu0 0.0
    %165 = vmatprep.subr.mxu0 0.0
    %166 = vmatpush2.msra.mxu0 0.0
    %167 = vmatprep.subr.mxu0 0.0
    %168 = vmatpush2.msra.mxu0 0.0
    %169 = vmatprep.subr.mxu0 0.0
    %170 = vmatpush2.msra.mxu0 0.0
    %171 = vmatprep.subr.mxu0 0.0
    %172 = vmatpush2.msra.mxu0 0.0
    %173 = vmatprep.mubr.f32.mxu0 0.0
    %174 = vmatmul.mubr.f32.gmra.mxu0 %v104
    %v175 = vpop.f32.mrf.mxu0
    %v176 = vadd.f32 0.0, %v175
    %v177 = vpop.f32.mrf.mxu0
    %v178 = vadd.f32 0.0, %v177
    %179 = vmatprep.mubr.f32.mxu0 0.0
    %180 = vmatmul.mubr.f32.gmra.mxu0 %v107
    %v181 = vpop.f32.mrf.mxu0
    %v182 = vadd.f32 0.0, %v181
    %v183 = vpop.f32.mrf.mxu0
    %v184 = vadd.f32 0.0, %v183
    %185 = vdwg.mxu0
    %187 = vrot.lane.b32.xlu0 %v176, 64
    %v188 = vpop.permute.xlu0 %187
    %vm189 = vcmask 130048
    %v190 = vsel %vm189, %v176, 0
    %v192 = vsel %vm189, %v188, 0
    %194 = vmatprep.subr.mxu0 0.0
    %195 = vmatpush1.xpose.msra.mxu0 0.0
    %196 = vmatprep.subr.mxu0 0.0
    %197 = vmatpush1.xpose.msra.mxu0 0.0
    %198 = vmatprep.subr.mxu0 0.0
    %199 = vmatpush1.xpose.msra.mxu0 0.0
    %200 = vmatprep.subr.mxu0 0.0
    %201 = vmatpush1.xpose.msra.mxu0 0.0
    %202 = vmatprep.subr.mxu0 0.0
    %203 = vmatpush1.xpose.msra.mxu0 0.0
    %204 = vmatprep.subr.mxu0 0.0
    %205 = vmatpush1.xpose.msra.mxu0 0.0
    %206 = vmatprep.subr.mxu0 0.0
    %207 = vmatpush1.xpose.msra.mxu0 0.0
    %208 = vmatprep.subr.mxu0 0.0
    %209 = vmatpush1.xpose.msra.mxu0 0.0
    %210 = vmatprep.subr.mxu0 0.0
    %211 = vmatpush1.xpose.msra.mxu0 0.0
    %212 = vmatprep.subr.mxu0 0.0
    %213 = vmatpush1.xpose.msra.mxu0 0.0
    %214 = vmatprep.subr.mxu0 0.0
    %215 = vmatpush1.xpose.msra.mxu0 0.0
    %216 = vmatprep.subr.mxu0 0.0
    %217 = vmatpush1.xpose.msra.mxu0 0.0
    %218 = vmatprep.subr.mxu0 0.0
    %219 = vmatpush1.xpose.msra.mxu0 0.0
    %220 = vmatprep.subr.mxu0 0.0
    %221 = vmatpush1.xpose.msra.mxu0 0.0
    %222 = vmatprep.subr.mxu0 0.0
    %223 = vmatpush1.xpose.msra.mxu0 0.0
    %224 = vmatprep.subr.mxu0 0.0
    %225 = vmatpush1.xpose.msra.mxu0 %v192
    %226 = vmatprep.subr.mxu0 0.0
    %227 = vmatpush2.xpose.msra.mxu0 0.0
    %228 = vmatprep.subr.mxu0 0.0
    %229 = vmatpush2.xpose.msra.mxu0 0.0
    %230 = vmatprep.subr.mxu0 0.0
    %231 = vmatpush2.xpose.msra.mxu0 0.0
    %232 = vmatprep.subr.mxu0 0.0
    %233 = vmatpush2.xpose.msra.mxu0 0.0
    %234 = vmatprep.subr.mxu0 0.0
    %235 = vmatpush2.xpose.msra.mxu0 0.0
    %236 = vmatprep.subr.mxu0 0.0
    %237 = vmatpush2.xpose.msra.mxu0 0.0
    %238 = vmatprep.subr.mxu0 0.0
    %239 = vmatpush2.xpose.msra.mxu0 0.0
    %240 = vmatprep.subr.mxu0 0.0
    %241 = vmatpush2.xpose.msra.mxu0 0.0
    %242 = vmatprep.subr.mxu0 0.0
    %243 = vmatpush2.xpose.msra.mxu0 0.0
    %244 = vmatprep.subr.mxu0 0.0
    %245 = vmatpush2.xpose.msra.mxu0 0.0
    %246 = vmatprep.subr.mxu0 0.0
    %247 = vmatpush2.xpose.msra.mxu0 0.0
    %248 = vmatprep.subr.mxu0 0.0
    %249 = vmatpush2.xpose.msra.mxu0 0.0
    %250 = vmatprep.subr.mxu0 0.0
    %251 = vmatpush2.xpose.msra.mxu0 0.0
    %252 = vmatprep.subr.mxu0 0.0
    %253 = vmatpush2.xpose.msra.mxu0 0.0
    %254 = vmatprep.subr.mxu0 0.0
    %255 = vmatpush2.xpose.msra.mxu0 0.0
    %256 = vmatprep.subr.mxu0 0.0
    %257 = vmatpush2.xpose.msra.mxu0 0.0
    %258 = vmatprep.mubr.f32.mxu0 0.0
    %259 = vmatmul.mubr.f32.gmra.mxu0 %v190
    %v260 = vpop.f32.mrf.mxu0
    %v261 = vadd.f32 0.0, %v260
    %v262 = vpop.f32.mrf.mxu0
    %263 = vdwg.mxu0
    %vm264 = vcmask 64512
    %v265 = vsel %vm264, %v261, -inf
    %266 = vmax.xlane.f32.xlu0 %v265
    %v267 = vpop.xlane.xlu0 %266
    %v268 = vsub.f32 %v261, %v267
    %v269 = vmul.f32 %v268, 1.442695
    %v270 = vpow.pop %v269
    %v271 = vsel %vm264, %v270, 0.0
    %272 = vadd.xlane.f32.xlu0 %v271
    %v273 = vpop.xlane.xlu0 %272
    %v274 = vrcp.pop %v273
    %v275 = vmul.f32 %v270, %v274
    %v277 = vsel %vm264, %v275, 0
    %279 = vmatprep.subr.mxu0 0.0
    %280 = vmatpush1.msra.mxu0 0.0
    %281 = vmatprep.subr.mxu0 0.0
    %282 = vmatpush1.msra.mxu0 0.0
    %283 = vmatprep.subr.mxu0 0.0
    %284 = vmatpush1.msra.mxu0 0.0
    %285 = vmatprep.subr.mxu0 0.0
    %286 = vmatpush1.msra.mxu0 0.0
    %287 = vmatprep.subr.mxu0 0.0
    %288 = vmatpush1.msra.mxu0 0.0
    %289 = vmatprep.subr.mxu0 0.0
    %290 = vmatpush1.msra.mxu0 0.0
    %291 = vmatprep.subr.mxu0 0.0
    %292 = vmatpush1.msra.mxu0 0.0
    %293 = vmatprep.subr.mxu0 0.0
    %294 = vmatpush1.msra.mxu0 0.0
    %295 = vmatprep.subr.mxu0 0.0
    %296 = vmatpush1.msra.mxu0 0.0
    %297 = vmatprep.subr.mxu0 0.0
    %298 = vmatpush1.msra.mxu0 0.0
    %299 = vmatprep.subr.mxu0 0.0
    %300 = vmatpush1.msra.mxu0 0.0
    %301 = vmatprep.subr.mxu0 0.0
    %302 = vmatpush1.msra.mxu0 0.0
    %303 = vmatprep.subr.mxu0 0.0
    %304 = vmatpush1.msra.mxu0 0.0
    %305 = vmatprep.subr.mxu0 0.0
    %306 = vmatpush1.msra.mxu0 0.0
    %307 = vmatprep.subr.mxu0 0.0
    %308 = vmatpush1.msra.mxu0 0.0
    %309 = vmatprep.subr.mxu0 0.0
    %310 = vmatpush1.msra.mxu0 %v178
    %311 = vmatprep.subr.mxu0 0.0
    %312 = vmatpush2.msra.mxu0 0.0
    %313 = vmatprep.subr.mxu0 0.0
    %314 = vmatpush2.msra.mxu0 0.0
    %315 = vmatprep.subr.mxu0 0.0
    %316 = vmatpush2.msra.mxu0 0.0
    %317 = vmatprep.subr.mxu0 0.0
    %318 = vmatpush2.msra.mxu0 0.0
    %319 = vmatprep.subr.mxu0 0.0
    %320 = vmatpush2.msra.mxu0 0.0
    %321 = vmatprep.subr.mxu0 0.0
    %322 = vmatpush2.msra.mxu0 0.0
    %323 = vmatprep.subr.mxu0 0.0
    %324 = vmatpush2.msra.mxu0 0.0
    %325 = vmatprep.subr.mxu0 0.0
    %326 = vmatpush2.msra.mxu0 0.0
    %327 = vmatprep.subr.mxu0 0.0
    %328 = vmatpush2.msra.mxu0 0.0
    %329 = vmatprep.subr.mxu0 0.0
    %330 = vmatpush2.msra.mxu0 0.0
    %331 = vmatprep.subr.mxu0 0.0
    %332 = vmatpush2.msra.mxu0 0.0
    %333 = vmatprep.subr.mxu0 0.0
    %334 = vmatpush2.msra.mxu0 0.0
    %335 = vmatprep.subr.mxu0 0.0
    %336 = vmatpush2.msra.mxu0 0.0
    %337 = vmatprep.subr.mxu0 0.0
    %338 = vmatpush2.msra.mxu0 0.0
    %339 = vmatprep.subr.mxu0 0.0
    %340 = vmatpush2.msra.mxu0 0.0
    %341 = vmatprep.subr.mxu0 0.0
    %342 = vmatpush2.msra.mxu0 0.0
    %343 = vmatprep.mubr.f32.mxu0 0.0
    %344 = vmatmul.mubr.f32.gmra.mxu0 %v277
    %v345 = vpop.f32.mrf.mxu0
    %v346 = vadd.f32 0.0, %v345
    %v347 = vpop.f32.mrf.mxu0
    %348 = vdwg.mxu0
    %v349 = vld [vmem:[#allocation5] sm:$0xff]
    %v350 = vld [vmem:[#allocation5 + $0x8] sm:$0xff]
    %351 = vrot.lane.b32.xlu0 %v176, 112
    %v352 = vpop.permute.xlu0 %351
    %353 = vrot.lane.b32.xlu0 %v176, 48
    %v354 = vpop.permute.xlu0 %353
    %v355 = vsel %vm189, %v352, 0
    %v357 = vsel %vm189, %v354, 0
    %359 = vmatprep.subr.mxu0 0.0
    %360 = vmatpush1.xpose.msra.mxu0 0.0
    %361 = vmatprep.subr.mxu0 0.0
    %362 = vmatpush1.xpose.msra.mxu0 0.0
    %363 = vmatprep.subr.mxu0 0.0
    %364 = vmatpush1.xpose.msra.mxu0 0.0
    %365 = vmatprep.subr.mxu0 0.0
    %366 = vmatpush1.xpose.msra.mxu0 0.0
    %367 = vmatprep.subr.mxu0 0.0
    %368 = vmatpush1.xpose.msra.mxu0 0.0
    %369 = vmatprep.subr.mxu0 0.0
    %370 = vmatpush1.xpose.msra.mxu0 0.0
    %371 = vmatprep.subr.mxu0 0.0
    %372 = vmatpush1.xpose.msra.mxu0 0.0
    %373 = vmatprep.subr.mxu0 0.0
    %374 = vmatpush1.xpose.msra.mxu0 0.0
    %375 = vmatprep.subr.mxu0 0.0
    %376 = vmatpush1.xpose.msra.mxu0 0.0
    %377 = vmatprep.subr.mxu0 0.0
    %378 = vmatpush1.xpose.msra.mxu0 0.0
    %379 = vmatprep.subr.mxu0 0.0
    %380 = vmatpush1.xpose.msra.mxu0 0.0
    %381 = vmatprep.subr.mxu0 0.0
    %382 = vmatpush1.xpose.msra.mxu0 0.0
    %383 = vmatprep.subr.mxu0 0.0
    %384 = vmatpush1.xpose.msra.mxu0 0.0
    %385 = vmatprep.subr.mxu0 0.0
    %386 = vmatpush1.xpose.msra.mxu0 0.0
    %387 = vmatprep.subr.mxu0 0.0
    %388 = vmatpush1.xpose.msra.mxu0 0.0
    %389 = vmatprep.subr.mxu0 0.0
    %390 = vmatpush1.xpose.msra.mxu0 %v357
    %391 = vmatprep.subr.mxu0 0.0
    %392 = vmatpush2.xpose.msra.mxu0 0.0
    %393 = vmatprep.subr.mxu0 0.0
    %394 = vmatpush2.xpose.msra.mxu0 0.0
    %395 = vmatprep.subr.mxu0 0.0
    %396 = vmatpush2.xpose.msra.mxu0 0.0
    %397 = vmatprep.subr.mxu0 0.0
    %398 = vmatpush2.xpose.msra.mxu0 0.0
    %399 = vmatprep.subr.mxu0 0.0
    %400 = vmatpush2.xpose.msra.mxu0 0.0
    %401 = vmatprep.subr.mxu0 0.0
    %402 = vmatpush2.xpose.msra.mxu0 0.0
    %403 = vmatprep.subr.mxu0 0.0
    %404 = vmatpush2.xpose.msra.mxu0 0.0
    %405 = vmatprep.subr.mxu0 0.0
    %406 = vmatpush2.xpose.msra.mxu0 0.0
    %407 = vmatprep.subr.mxu0 0.0
    %408 = vmatpush2.xpose.msra.mxu0 0.0
    %409 = vmatprep.subr.mxu0 0.0
    %410 = vmatpush2.xpose.msra.mxu0 0.0
    %411 = vmatprep.subr.mxu0 0.0
    %412 = vmatpush2.xpose.msra.mxu0 0.0
    %413 = vmatprep.subr.mxu0 0.0
    %414 = vmatpush2.xpose.msra.mxu0 0.0
    %415 = vmatprep.subr.mxu0 0.0
    %416 = vmatpush2.xpose.msra.mxu0 0.0
    %417 = vmatprep.subr.mxu0 0.0
    %418 = vmatpush2.xpose.msra.mxu0 0.0
    %419 = vmatprep.subr.mxu0 0.0
    %420 = vmatpush2.xpose.msra.mxu0 0.0
    %421 = vmatprep.subr.mxu0 0.0
    %422 = vmatpush2.xpose.msra.mxu0 0.0
    %423 = vmatprep.mubr.f32.mxu0 0.0
    %424 = vmatmul.mubr.f32.gmra.mxu0 %v355
    %v425 = vpop.f32.mrf.mxu0
    %v426 = vadd.f32 0.0, %v425
    %v427 = vpop.f32.mrf.mxu0
    %428 = vdwg.mxu0
    %v429 = vsel %vm264, %v426, -inf
    %430 = vmax.xlane.f32.xlu0 %v429
    %v431 = vpop.xlane.xlu0 %430
    %v432 = vsub.f32 %v426, %v431
    %v433 = vmul.f32 %v432, 1.442695
    %v434 = vpow.pop %v433
    %v435 = vsel %vm264, %v434, 0.0
    %436 = vadd.xlane.f32.xlu0 %v435
    %v437 = vpop.xlane.xlu0 %436
    %v438 = vrcp.pop %v437
    %v439 = vmul.f32 %v434, %v438
    %441 = vrot.lane.b32.xlu0 %v178, 112
    %v442 = vpop.permute.xlu0 %441
    %v445 = vsel %vm264, %v439, 0
    %447 = vmatprep.subr.mxu0 0.0
    %448 = vmatpush1.msra.mxu0 0.0
    %449 = vmatprep.subr.mxu0 0.0
    %450 = vmatpush1.msra.mxu0 0.0
    %451 = vmatprep.subr.mxu0 0.0
    %452 = vmatpush1.msra.mxu0 0.0
    %453 = vmatprep.subr.mxu0 0.0
    %454 = vmatpush1.msra.mxu0 0.0
    %455 = vmatprep.subr.mxu0 0.0
    %456 = vmatpush1.msra.mxu0 0.0
    %457 = vmatprep.subr.mxu0 0.0
    %458 = vmatpush1.msra.mxu0 0.0
    %459 = vmatprep.subr.mxu0 0.0
    %460 = vmatpush1.msra.mxu0 0.0
    %461 = vmatprep.subr.mxu0 0.0
    %462 = vmatpush1.msra.mxu0 0.0
    %463 = vmatprep.subr.mxu0 0.0
    %464 = vmatpush1.msra.mxu0 0.0
    %465 = vmatprep.subr.mxu0 0.0
    %466 = vmatpush1.msra.mxu0 0.0
    %467 = vmatprep.subr.mxu0 0.0
    %468 = vmatpush1.msra.mxu0 0.0
    %469 = vmatprep.subr.mxu0 0.0
    %470 = vmatpush1.msra.mxu0 0.0
    %471 = vmatprep.subr.mxu0 0.0
    %472 = vmatpush1.msra.mxu0 0.0
    %473 = vmatprep.subr.mxu0 0.0
    %474 = vmatpush1.msra.mxu0 0.0
    %475 = vmatprep.subr.mxu0 0.0
    %476 = vmatpush1.msra.mxu0 0.0
    %477 = vmatprep.subr.mxu0 0.0
    %478 = vmatpush1.msra.mxu0 %v442
    %479 = vmatprep.subr.mxu0 0.0
    %480 = vmatpush2.msra.mxu0 0.0
    %481 = vmatprep.subr.mxu0 0.0
    %482 = vmatpush2.msra.mxu0 0.0
    %483 = vmatprep.subr.mxu0 0.0
    %484 = vmatpush2.msra.mxu0 0.0
    %485 = vmatprep.subr.mxu0 0.0
    %486 = vmatpush2.msra.mxu0 0.0
    %487 = vmatprep.subr.mxu0 0.0
    %488 = vmatpush2.msra.mxu0 0.0
    %489 = vmatprep.subr.mxu0 0.0
    %490 = vmatpush2.msra.mxu0 0.0
    %491 = vmatprep.subr.mxu0 0.0
    %492 = vmatpush2.msra.mxu0 0.0
    %493 = vmatprep.subr.mxu0 0.0
    %494 = vmatpush2.msra.mxu0 0.0
    %495 = vmatprep.subr.mxu0 0.0
    %496 = vmatpush2.msra.mxu0 0.0
    %497 = vmatprep.subr.mxu0 0.0
    %498 = vmatpush2.msra.mxu0 0.0
    %499 = vmatprep.subr.mxu0 0.0
    %500 = vmatpush2.msra.mxu0 0.0
    %501 = vmatprep.subr.mxu0 0.0
    %502 = vmatpush2.msra.mxu0 0.0
    %503 = vmatprep.subr.mxu0 0.0
    %504 = vmatpush2.msra.mxu0 0.0
    %505 = vmatprep.subr.mxu0 0.0
    %506 = vmatpush2.msra.mxu0 0.0
    %507 = vmatprep.subr.mxu0 0.0
    %508 = vmatpush2.msra.mxu0 0.0
    %509 = vmatprep.subr.mxu0 0.0
    %510 = vmatpush2.msra.mxu0 0.0
    %511 = vmatprep.mubr.f32.mxu0 0.0
    %512 = vmatmul.mubr.f32.gmra.mxu0 %v445
    %v513 = vpop.f32.mrf.mxu0
    %v514 = vadd.f32 0.0, %v513
    %v515 = vpop.f32.mrf.mxu0
    %516 = vdwg.mxu0
    %v517 = vld [vmem:[#allocation5 + $0x10] sm:$0xff]
    %v518 = vld [vmem:[#allocation5 + $0x18] sm:$0xff]
    %v520 = vsel %vm189, %v514, 0
    %522 = vmatprep.subr.mxu0 0.0
    %523 = vmatpush1.msra.mxu0 0.0
    %524 = vmatprep.subr.mxu0 0.0
    %525 = vmatpush1.msra.mxu0 0.0
    %526 = vmatprep.subr.mxu0 0.0
    %527 = vmatpush1.msra.mxu0 0.0
    %528 = vmatprep.subr.mxu0 0.0
    %529 = vmatpush1.msra.mxu0 0.0
    %530 = vmatprep.subr.mxu0 0.0
    %531 = vmatpush1.msra.mxu0 0.0
    %532 = vmatprep.subr.mxu0 0.0
    %533 = vmatpush1.msra.mxu0 0.0
    %534 = vmatprep.subr.mxu0 0.0
    %535 = vmatpush1.msra.mxu0 0.0
    %536 = vmatprep.subr.mxu0 0.0
    %537 = vmatpush1.msra.mxu0 0.0
    %538 = vmatprep.subr.mxu0 0.0
    %539 = vmatpush1.msra.mxu0 0.0
    %540 = vmatprep.subr.mxu0 0.0
    %541 = vmatpush1.msra.mxu0 0.0
    %542 = vmatprep.subr.mxu0 0.0
    %543 = vmatpush1.msra.mxu0 0.0
    %544 = vmatprep.subr.mxu0 0.0
    %545 = vmatpush1.msra.mxu0 0.0
    %546 = vmatprep.subr.mxu0 0.0
    %547 = vmatpush1.msra.mxu0 0.0
    %548 = vmatprep.subr.mxu0 0.0
    %549 = vmatpush1.msra.mxu0 0.0
    %550 = vmatprep.subr.mxu0 0.0
    %551 = vmatpush1.msra.mxu0 %v518
    %552 = vmatprep.subr.mxu0 0.0
    %553 = vmatpush1.msra.mxu0 %v517
    %554 = vmatprep.subr.mxu0 0.0
    %555 = vmatpush2.msra.mxu0 0.0
    %556 = vmatprep.subr.mxu0 0.0
    %557 = vmatpush2.msra.mxu0 0.0
    %558 = vmatprep.subr.mxu0 0.0
    %559 = vmatpush2.msra.mxu0 0.0
    %560 = vmatprep.subr.mxu0 0.0
    %561 = vmatpush2.msra.mxu0 0.0
    %562 = vmatprep.subr.mxu0 0.0
    %563 = vmatpush2.msra.mxu0 0.0
    %564 = vmatprep.subr.mxu0 0.0
    %565 = vmatpush2.msra.mxu0 0.0
    %566 = vmatprep.subr.mxu0 0.0
    %567 = vmatpush2.msra.mxu0 0.0
    %568 = vmatprep.subr.mxu0 0.0
    %569 = vmatpush2.msra.mxu0 0.0
    %570 = vmatprep.subr.mxu0 0.0
    %571 = vmatpush2.msra.mxu0 0.0
    %572 = vmatprep.subr.mxu0 0.0
    %573 = vmatpush2.msra.mxu0 0.0
    %574 = vmatprep.subr.mxu0 0.0
    %575 = vmatpush2.msra.mxu0 0.0
    %576 = vmatprep.subr.mxu0 0.0
    %577 = vmatpush2.msra.mxu0 0.0
    %578 = vmatprep.subr.mxu0 0.0
    %579 = vmatpush2.msra.mxu0 0.0
    %580 = vmatprep.subr.mxu0 0.0
    %581 = vmatpush2.msra.mxu0 0.0
    %582 = vmatprep.subr.mxu0 0.0
    %583 = vmatpush2.msra.mxu0 0.0
    %584 = vmatprep.subr.mxu0 0.0
    %585 = vmatpush2.msra.mxu0 0.0
    %586 = vmatprep.mubr.f32.mxu0 0.0
    %587 = vmatmul.mubr.f32.gmra.mxu0 %v520
    %v588 = vpop.f32.mrf.mxu0
    %v589 = vadd.f32 0.0, %v588
    %v590 = vpop.f32.mrf.mxu0
    %591 = vdwg.mxu0
    %v593 = vsel %vm189, %v346, 0
    %595 = vmatprep.subr.mxu0 0.0
    %596 = vmatpush1.msra.mxu0 0.0
    %597 = vmatprep.subr.mxu0 0.0
    %598 = vmatpush1.msra.mxu0 0.0
    %599 = vmatprep.subr.mxu0 0.0
    %600 = vmatpush1.msra.mxu0 0.0
    %601 = vmatprep.subr.mxu0 0.0
    %602 = vmatpush1.msra.mxu0 0.0
    %603 = vmatprep.subr.mxu0 0.0
    %604 = vmatpush1.msra.mxu0 0.0
    %605 = vmatprep.subr.mxu0 0.0
    %606 = vmatpush1.msra.mxu0 0.0
    %607 = vmatprep.subr.mxu0 0.0
    %608 = vmatpush1.msra.mxu0 0.0
    %609 = vmatprep.subr.mxu0 0.0
    %610 = vmatpush1.msra.mxu0 0.0
    %611 = vmatprep.subr.mxu0 0.0
    %612 = vmatpush1.msra.mxu0 0.0
    %613 = vmatprep.subr.mxu0 0.0
    %614 = vmatpush1.msra.mxu0 0.0
    %615 = vmatprep.subr.mxu0 0.0
    %616 = vmatpush1.msra.mxu0 0.0
    %617 = vmatprep.subr.mxu0 0.0
    %618 = vmatpush1.msra.mxu0 0.0
    %619 = vmatprep.subr.mxu0 0.0
    %620 = vmatpush1.msra.mxu0 0.0
    %621 = vmatprep.subr.mxu0 0.0
    %622 = vmatpush1.msra.mxu0 0.0
    %623 = vmatprep.subr.mxu0 0.0
    %624 = vmatpush1.msra.mxu0 %v350
    %625 = vmatprep.subr.mxu0 0.0
    %626 = vmatpush1.msra.mxu0 %v349
    %627 = vmatprep.subr.mxu0 0.0
    %628 = vmatpush2.msra.mxu0 0.0
    %629 = vmatprep.subr.mxu0 0.0
    %630 = vmatpush2.msra.mxu0 0.0
    %631 = vmatprep.subr.mxu0 0.0
    %632 = vmatpush2.msra.mxu0 0.0
    %633 = vmatprep.subr.mxu0 0.0
    %634 = vmatpush2.msra.mxu0 0.0
    %635 = vmatprep.subr.mxu0 0.0
    %636 = vmatpush2.msra.mxu0 0.0
    %637 = vmatprep.subr.mxu0 0.0
    %638 = vmatpush2.msra.mxu0 0.0
    %639 = vmatprep.subr.mxu0 0.0
    %640 = vmatpush2.msra.mxu0 0.0
    %641 = vmatprep.subr.mxu0 0.0
    %642 = vmatpush2.msra.mxu0 0.0
    %643 = vmatprep.subr.mxu0 0.0
    %644 = vmatpush2.msra.mxu0 0.0
    %645 = vmatprep.subr.mxu0 0.0
    %646 = vmatpush2.msra.mxu0 0.0
    %647 = vmatprep.subr.mxu0 0.0
    %648 = vmatpush2.msra.mxu0 0.0
    %649 = vmatprep.subr.mxu0 0.0
    %650 = vmatpush2.msra.mxu0 0.0
    %651 = vmatprep.subr.mxu0 0.0
    %652 = vmatpush2.msra.mxu0 0.0
    %653 = vmatprep.subr.mxu0 0.0
    %654 = vmatpush2.msra.mxu0 0.0
    %655 = vmatprep.subr.mxu0 0.0
    %656 = vmatpush2.msra.mxu0 0.0
    %657 = vmatprep.subr.mxu0 0.0
    %658 = vmatpush2.msra.mxu0 0.0
    %659 = vmatprep.mubr.f32.mxu0 0.0
    %660 = vmatmul.mubr.f32.gmra.mxu0 %v593
    %v661 = vpop.f32.mrf.mxu0
    %v662 = vadd.f32 %v589, %v661
    %v663 = vpop.f32.mrf.mxu0
    %664 = vdwg.mxu0
    %665 = vrot.lane.b32.xlu0 %v176, 96
    %v666 = vpop.permute.xlu0 %665
    %667 = vrot.lane.b32.xlu0 %v176, 32
    %v668 = vpop.permute.xlu0 %667
    %v669 = vsel %vm189, %v666, 0
    %v671 = vsel %vm189, %v668, 0
    %673 = vmatprep.subr.mxu0 0.0
    %674 = vmatpush1.xpose.msra.mxu0 0.0
    %675 = vmatprep.subr.mxu0 0.0
    %676 = vmatpush1.xpose.msra.mxu0 0.0
    %677 = vmatprep.subr.mxu0 0.0
    %678 = vmatpush1.xpose.msra.mxu0 0.0
    %679 = vmatprep.subr.mxu0 0.0
    %680 = vmatpush1.xpose.msra.mxu0 0.0
    %681 = vmatprep.subr.mxu0 0.0
    %682 = vmatpush1.xpose.msra.mxu0 0.0
    %683 = vmatprep.subr.mxu0 0.0
    %684 = vmatpush1.xpose.msra.mxu0 0.0
    %685 = vmatprep.subr.mxu0 0.0
    %686 = vmatpush1.xpose.msra.mxu0 0.0
    %687 = vmatprep.subr.mxu0 0.0
    %688 = vmatpush1.xpose.msra.mxu0 0.0
    %689 = vmatprep.subr.mxu0 0.0
    %690 = vmatpush1.xpose.msra.mxu0 0.0
    %691 = vmatprep.subr.mxu0 0.0
    %692 = vmatpush1.xpose.msra.mxu0 0.0
    %693 = vmatprep.subr.mxu0 0.0
    %694 = vmatpush1.xpose.msra.mxu0 0.0
    %695 = vmatprep.subr.mxu0 0.0
    %696 = vmatpush1.xpose.msra.mxu0 0.0
    %697 = vmatprep.subr.mxu0 0.0
    %698 = vmatpush1.xpose.msra.mxu0 0.0
    %699 = vmatprep.subr.mxu0 0.0
    %700 = vmatpush1.xpose.msra.mxu0 0.0
    %701 = vmatprep.subr.mxu0 0.0
    %702 = vmatpush1.xpose.msra.mxu0 0.0
    %703 = vmatprep.subr.mxu0 0.0
    %704 = vmatpush1.xpose.msra.mxu0 %v671
    %705 = vmatprep.subr.mxu0 0.0
    %706 = vmatpush2.xpose.msra.mxu0 0.0
    %707 = vmatprep.subr.mxu0 0.0
    %708 = vmatpush2.xpose.msra.mxu0 0.0
    %709 = vmatprep.subr.mxu0 0.0
    %710 = vmatpush2.xpose.msra.mxu0 0.0
    %711 = vmatprep.subr.mxu0 0.0
    %712 = vmatpush2.xpose.msra.mxu0 0.0
    %713 = vmatprep.subr.mxu0 0.0
    %714 = vmatpush2.xpose.msra.mxu0 0.0
    %715 = vmatprep.subr.mxu0 0.0
    %716 = vmatpush2.xpose.msra.mxu0 0.0
    %717 = vmatprep.subr.mxu0 0.0
    %718 = vmatpush2.xpose.msra.mxu0 0.0
    %719 = vmatprep.subr.mxu0 0.0
    %720 = vmatpush2.xpose.msra.mxu0 0.0
    %721 = vmatprep.subr.mxu0 0.0
    %722 = vmatpush2.xpose.msra.mxu0 0.0
    %723 = vmatprep.subr.mxu0 0.0
    %724 = vmatpush2.xpose.msra.mxu0 0.0
    %725 = vmatprep.subr.mxu0 0.0
    %726 = vmatpush2.xpose.msra.mxu0 0.0
    %727 = vmatprep.subr.mxu0 0.0
    %728 = vmatpush2.xpose.msra.mxu0 0.0
    %729 = vmatprep.subr.mxu0 0.0
    %730 = vmatpush2.xpose.msra.mxu0 0.0
    %731 = vmatprep.subr.mxu0 0.0
    %732 = vmatpush2.xpose.msra.mxu0 0.0
    %733 = vmatprep.subr.mxu0 0.0
    %734 = vmatpush2.xpose.msra.mxu0 0.0
    %735 = vmatprep.subr.mxu0 0.0
    %736 = vmatpush2.xpose.msra.mxu0 0.0
    %737 = vmatprep.mubr.f32.mxu0 0.0
    %738 = vmatmul.mubr.f32.gmra.mxu0 %v669
    %v739 = vpop.f32.mrf.mxu0
    %v740 = vadd.f32 0.0, %v739
    %v741 = vpop.f32.mrf.mxu0
    %742 = vdwg.mxu0
    %v743 = vsel %vm264, %v740, -inf
    %744 = vmax.xlane.f32.xlu0 %v743
    %v745 = vpop.xlane.xlu0 %744
    %v746 = vsub.f32 %v740, %v745
    %v747 = vmul.f32 %v746, 1.442695
    %v748 = vpow.pop %v747
    %v749 = vsel %vm264, %v748, 0.0
    %750 = vadd.xlane.f32.xlu0 %v749
    %v751 = vpop.xlane.xlu0 %750
    %v752 = vrcp.pop %v751
    %v753 = vmul.f32 %v748, %v752
    %754 = vrot.lane.b32.xlu0 %v178, 96
    %v755 = vpop.permute.xlu0 %754
    %v758 = vsel %vm264, %v753, 0
    %760 = vmatprep.subr.mxu0 0.0
    %761 = vmatpush1.msra.mxu0 0.0
    %762 = vmatprep.subr.mxu0 0.0
    %763 = vmatpush1.msra.mxu0 0.0
    %764 = vmatprep.subr.mxu0 0.0
    %765 = vmatpush1.msra.mxu0 0.0
    %766 = vmatprep.subr.mxu0 0.0
    %767 = vmatpush1.msra.mxu0 0.0
    %768 = vmatprep.subr.mxu0 0.0
    %769 = vmatpush1.msra.mxu0 0.0
    %770 = vmatprep.subr.mxu0 0.0
    %771 = vmatpush1.msra.mxu0 0.0
    %772 = vmatprep.subr.mxu0 0.0
    %773 = vmatpush1.msra.mxu0 0.0
    %774 = vmatprep.subr.mxu0 0.0
    %775 = vmatpush1.msra.mxu0 0.0
    %776 = vmatprep.subr.mxu0 0.0
    %777 = vmatpush1.msra.mxu0 0.0
    %778 = vmatprep.subr.mxu0 0.0
    %779 = vmatpush1.msra.mxu0 0.0
    %780 = vmatprep.subr.mxu0 0.0
    %781 = vmatpush1.msra.mxu0 0.0
    %782 = vmatprep.subr.mxu0 0.0
    %783 = vmatpush1.msra.mxu0 0.0
    %784 = vmatprep.subr.mxu0 0.0
    %785 = vmatpush1.msra.mxu0 0.0
    %786 = vmatprep.subr.mxu0 0.0
    %787 = vmatpush1.msra.mxu0 0.0
    %788 = vmatprep.subr.mxu0 0.0
    %789 = vmatpush1.msra.mxu0 0.0
    %790 = vmatprep.subr.mxu0 0.0
    %791 = vmatpush1.msra.mxu0 %v755
    %792 = vmatprep.subr.mxu0 0.0
    %793 = vmatpush2.msra.mxu0 0.0
    %794 = vmatprep.subr.mxu0 0.0
    %795 = vmatpush2.msra.mxu0 0.0
    %796 = vmatprep.subr.mxu0 0.0
    %797 = vmatpush2.msra.mxu0 0.0
    %798 = vmatprep.subr.mxu0 0.0
    %799 = vmatpush2.msra.mxu0 0.0
    %800 = vmatprep.subr.mxu0 0.0
    %801 = vmatpush2.msra.mxu0 0.0
    %802 = vmatprep.subr.mxu0 0.0
    %803 = vmatpush2.msra.mxu0 0.0
    %804 = vmatprep.subr.mxu0 0.0
    %805 = vmatpush2.msra.mxu0 0.0
    %806 = vmatprep.subr.mxu0 0.0
    %807 = vmatpush2.msra.mxu0 0.0
    %808 = vmatprep.subr.mxu0 0.0
    %809 = vmatpush2.msra.mxu0 0.0
    %810 = vmatprep.subr.mxu0 0.0
    %811 = vmatpush2.msra.mxu0 0.0
    %812 = vmatprep.subr.mxu0 0.0
    %813 = vmatpush2.msra.mxu0 0.0
    %814 = vmatprep.subr.mxu0 0.0
    %815 = vmatpush2.msra.mxu0 0.0
    %816 = vmatprep.subr.mxu0 0.0
    %817 = vmatpush2.msra.mxu0 0.0
    %818 = vmatprep.subr.mxu0 0.0
    %819 = vmatpush2.msra.mxu0 0.0
    %820 = vmatprep.subr.mxu0 0.0
    %821 = vmatpush2.msra.mxu0 0.0
    %822 = vmatprep.subr.mxu0 0.0
    %823 = vmatpush2.msra.mxu0 0.0
    %824 = vmatprep.mubr.f32.mxu0 0.0
    %825 = vmatmul.mubr.f32.gmra.mxu0 %v758
    %v826 = vpop.f32.mrf.mxu0
    %v827 = vadd.f32 0.0, %v826
    %v828 = vpop.f32.mrf.mxu0
    %829 = vdwg.mxu0
    %v830 = vld [vmem:[#allocation5 + $0x20] sm:$0xff]
    %v831 = vld [vmem:[#allocation5 + $0x28] sm:$0xff]
    %v833 = vsel %vm189, %v827, 0
    %835 = vmatprep.subr.mxu0 0.0
    %836 = vmatpush1.msra.mxu0 0.0
    %837 = vmatprep.subr.mxu0 0.0
    %838 = vmatpush1.msra.mxu0 0.0
    %839 = vmatprep.subr.mxu0 0.0
    %840 = vmatpush1.msra.mxu0 0.0
    %841 = vmatprep.subr.mxu0 0.0
    %842 = vmatpush1.msra.mxu0 0.0
    %843 = vmatprep.subr.mxu0 0.0
    %844 = vmatpush1.msra.mxu0 0.0
    %845 = vmatprep.subr.mxu0 0.0
    %846 = vmatpush1.msra.mxu0 0.0
    %847 = vmatprep.subr.mxu0 0.0
    %848 = vmatpush1.msra.mxu0 0.0
    %849 = vmatprep.subr.mxu0 0.0
    %850 = vmatpush1.msra.mxu0 0.0
    %851 = vmatprep.subr.mxu0 0.0
    %852 = vmatpush1.msra.mxu0 0.0
    %853 = vmatprep.subr.mxu0 0.0
    %854 = vmatpush1.msra.mxu0 0.0
    %855 = vmatprep.subr.mxu0 0.0
    %856 = vmatpush1.msra.mxu0 0.0
    %857 = vmatprep.subr.mxu0 0.0
    %858 = vmatpush1.msra.mxu0 0.0
    %859 = vmatprep.subr.mxu0 0.0
    %860 = vmatpush1.msra.mxu0 0.0
    %861 = vmatprep.subr.mxu0 0.0
    %862 = vmatpush1.msra.mxu0 0.0
    %863 = vmatprep.subr.mxu0 0.0
    %864 = vmatpush1.msra.mxu0 %v831
    %865 = vmatprep.subr.mxu0 0.0
    %866 = vmatpush1.msra.mxu0 %v830
    %867 = vmatprep.subr.mxu0 0.0
    %868 = vmatpush2.msra.mxu0 0.0
    %869 = vmatprep.subr.mxu0 0.0
    %870 = vmatpush2.msra.mxu0 0.0
    %871 = vmatprep.subr.mxu0 0.0
    %872 = vmatpush2.msra.mxu0 0.0
    %873 = vmatprep.subr.mxu0 0.0
    %874 = vmatpush2.msra.mxu0 0.0
    %875 = vmatprep.subr.mxu0 0.0
    %876 = vmatpush2.msra.mxu0 0.0
    %877 = vmatprep.subr.mxu0 0.0
    %878 = vmatpush2.msra.mxu0 0.0
    %879 = vmatprep.subr.mxu0 0.0
    %880 = vmatpush2.msra.mxu0 0.0
    %881 = vmatprep.subr.mxu0 0.0
    %882 = vmatpush2.msra.mxu0 0.0
    %883 = vmatprep.subr.mxu0 0.0
    %884 = vmatpush2.msra.mxu0 0.0
    %885 = vmatprep.subr.mxu0 0.0
    %886 = vmatpush2.msra.mxu0 0.0
    %887 = vmatprep.subr.mxu0 0.0
    %888 = vmatpush2.msra.mxu0 0.0
    %889 = vmatprep.subr.mxu0 0.0
    %890 = vmatpush2.msra.mxu0 0.0
    %891 = vmatprep.subr.mxu0 0.0
    %892 = vmatpush2.msra.mxu0 0.0
    %893 = vmatprep.subr.mxu0 0.0
    %894 = vmatpush2.msra.mxu0 0.0
    %895 = vmatprep.subr.mxu0 0.0
    %896 = vmatpush2.msra.mxu0 0.0
    %897 = vmatprep.subr.mxu0 0.0
    %898 = vmatpush2.msra.mxu0 0.0
    %899 = vmatprep.mubr.f32.mxu0 0.0
    %900 = vmatmul.mubr.f32.gmra.mxu0 %v833
    %v901 = vpop.f32.mrf.mxu0
    %v902 = vadd.f32 0.0, %v901
    %v903 = vpop.f32.mrf.mxu0
    %904 = vdwg.mxu0
    %v905 = vadd.f32 %v662, %v902
    %906 = vrot.lane.b32.xlu0 %v176, 80
    %v907 = vpop.permute.xlu0 %906
    %908 = vrot.lane.b32.xlu0 %v176, 16
    %v909 = vpop.permute.xlu0 %908
    %v910 = vsel %vm189, %v907, 0
    %v912 = vsel %vm189, %v909, 0
    %914 = vmatprep.subr.mxu0 0.0
    %915 = vmatpush1.xpose.msra.mxu0 0.0
    %916 = vmatprep.subr.mxu0 0.0
    %917 = vmatpush1.xpose.msra.mxu0 0.0
    %918 = vmatprep.subr.mxu0 0.0
    %919 = vmatpush1.xpose.msra.mxu0 0.0
    %920 = vmatprep.subr.mxu0 0.0
    %921 = vmatpush1.xpose.msra.mxu0 0.0
    %922 = vmatprep.subr.mxu0 0.0
    %923 = vmatpush1.xpose.msra.mxu0 0.0
    %924 = vmatprep.subr.mxu0 0.0
    %925 = vmatpush1.xpose.msra.mxu0 0.0
    %926 = vmatprep.subr.mxu0 0.0
    %927 = vmatpush1.xpose.msra.mxu0 0.0
    %928 = vmatprep.subr.mxu0 0.0
    %929 = vmatpush1.xpose.msra.mxu0 0.0
    %930 = vmatprep.subr.mxu0 0.0
    %931 = vmatpush1.xpose.msra.mxu0 0.0
    %932 = vmatprep.subr.mxu0 0.0
    %933 = vmatpush1.xpose.msra.mxu0 0.0
    %934 = vmatprep.subr.mxu0 0.0
    %935 = vmatpush1.xpose.msra.mxu0 0.0
    %936 = vmatprep.subr.mxu0 0.0
    %937 = vmatpush1.xpose.msra.mxu0 0.0
    %938 = vmatprep.subr.mxu0 0.0
    %939 = vmatpush1.xpose.msra.mxu0 0.0
    %940 = vmatprep.subr.mxu0 0.0
    %941 = vmatpush1.xpose.msra.mxu0 0.0
    %942 = vmatprep.subr.mxu0 0.0
    %943 = vmatpush1.xpose.msra.mxu0 0.0
    %944 = vmatprep.subr.mxu0 0.0
    %945 = vmatpush1.xpose.msra.mxu0 %v912
    %946 = vmatprep.subr.mxu0 0.0
    %947 = vmatpush2.xpose.msra.mxu0 0.0
    %948 = vmatprep.subr.mxu0 0.0
    %949 = vmatpush2.xpose.msra.mxu0 0.0
    %950 = vmatprep.subr.mxu0 0.0
    %951 = vmatpush2.xpose.msra.mxu0 0.0
    %952 = vmatprep.subr.mxu0 0.0
    %953 = vmatpush2.xpose.msra.mxu0 0.0
    %954 = vmatprep.subr.mxu0 0.0
    %955 = vmatpush2.xpose.msra.mxu0 0.0
    %956 = vmatprep.subr.mxu0 0.0
    %957 = vmatpush2.xpose.msra.mxu0 0.0
    %958 = vmatprep.subr.mxu0 0.0
    %959 = vmatpush2.xpose.msra.mxu0 0.0
    %960 = vmatprep.subr.mxu0 0.0
    %961 = vmatpush2.xpose.msra.mxu0 0.0
    %962 = vmatprep.subr.mxu0 0.0
    %963 = vmatpush2.xpose.msra.mxu0 0.0
    %964 = vmatprep.subr.mxu0 0.0
    %965 = vmatpush2.xpose.msra.mxu0 0.0
    %966 = vmatprep.subr.mxu0 0.0
    %967 = vmatpush2.xpose.msra.mxu0 0.0
    %968 = vmatprep.subr.mxu0 0.0
    %969 = vmatpush2.xpose.msra.mxu0 0.0
    %970 = vmatprep.subr.mxu0 0.0
    %971 = vmatpush2.xpose.msra.mxu0 0.0
    %972 = vmatprep.subr.mxu0 0.0
    %973 = vmatpush2.xpose.msra.mxu0 0.0
    %974 = vmatprep.subr.mxu0 0.0
    %975 = vmatpush2.xpose.msra.mxu0 0.0
    %976 = vmatprep.subr.mxu0 0.0
    %977 = vmatpush2.xpose.msra.mxu0 0.0
    %978 = vmatprep.mubr.f32.mxu0 0.0
    %979 = vmatmul.mubr.f32.gmra.mxu0 %v910
    %v980 = vpop.f32.mrf.mxu0
    %v981 = vadd.f32 0.0, %v980
    %v982 = vpop.f32.mrf.mxu0
    %983 = vdwg.mxu0
    %v984 = vsel %vm264, %v981, -inf
    %985 = vmax.xlane.f32.xlu0 %v984
    %v986 = vpop.xlane.xlu0 %985
    %v987 = vsub.f32 %v981, %v986
    %v988 = vmul.f32 %v987, 1.442695
    %v989 = vpow.pop %v988
    %v990 = vsel %vm264, %v989, 0.0
    %991 = vadd.xlane.f32.xlu0 %v990
    %v992 = vpop.xlane.xlu0 %991
    %v993 = vrcp.pop %v992
    %v994 = vmul.f32 %v989, %v993
    %995 = vrot.lane.b32.xlu0 %v178, 80
    %v996 = vpop.permute.xlu0 %995
    %v999 = vsel %vm264, %v994, 0
    %1001 = vmatprep.subr.mxu0 0.0
    %1002 = vmatpush1.msra.mxu0 0.0
    %1003 = vmatprep.subr.mxu0 0.0
    %1004 = vmatpush1.msra.mxu0 0.0
    %1005 = vmatprep.subr.mxu0 0.0
    %1006 = vmatpush1.msra.mxu0 0.0
    %1007 = vmatprep.subr.mxu0 0.0
    %1008 = vmatpush1.msra.mxu0 0.0
    %1009 = vmatprep.subr.mxu0 0.0
    %1010 = vmatpush1.msra.mxu0 0.0
    %1011 = vmatprep.subr.mxu0 0.0
    %1012 = vmatpush1.msra.mxu0 0.0
    %1013 = vmatprep.subr.mxu0 0.0
    %1014 = vmatpush1.msra.mxu0 0.0
    %1015 = vmatprep.subr.mxu0 0.0
    %1016 = vmatpush1.msra.mxu0 0.0
    %1017 = vmatprep.subr.mxu0 0.0
    %1018 = vmatpush1.msra.mxu0 0.0
    %1019 = vmatprep.subr.mxu0 0.0
    %1020 = vmatpush1.msra.mxu0 0.0
    %1021 = vmatprep.subr.mxu0 0.0
    %1022 = vmatpush1.msra.mxu0 0.0
    %1023 = vmatprep.subr.mxu0 0.0
    %1024 = vmatpush1.msra.mxu0 0.0
    %1025 = vmatprep.subr.mxu0 0.0
    %1026 = vmatpush1.msra.mxu0 0.0
    %1027 = vmatprep.subr.mxu0 0.0
    %1028 = vmatpush1.msra.mxu0 0.0
    %1029 = vmatprep.subr.mxu0 0.0
    %1030 = vmatpush1.msra.mxu0 0.0
    %1031 = vmatprep.subr.mxu0 0.0
    %1032 = vmatpush1.msra.mxu0 %v996
    %1033 = vmatprep.subr.mxu0 0.0
    %1034 = vmatpush2.msra.mxu0 0.0
    %1035 = vmatprep.subr.mxu0 0.0
    %1036 = vmatpush2.msra.mxu0 0.0
    %1037 = vmatprep.subr.mxu0 0.0
    %1038 = vmatpush2.msra.mxu0 0.0
    %1039 = vmatprep.subr.mxu0 0.0
    %1040 = vmatpush2.msra.mxu0 0.0
    %1041 = vmatprep.subr.mxu0 0.0
    %1042 = vmatpush2.msra.mxu0 0.0
    %1043 = vmatprep.subr.mxu0 0.0
    %1044 = vmatpush2.msra.mxu0 0.0
    %1045 = vmatprep.subr.mxu0 0.0
    %1046 = vmatpush2.msra.mxu0 0.0
    %1047 = vmatprep.subr.mxu0 0.0
    %1048 = vmatpush2.msra.mxu0 0.0
    %1049 = vmatprep.subr.mxu0 0.0
    %1050 = vmatpush2.msra.mxu0 0.0
    %1051 = vmatprep.subr.mxu0 0.0
    %1052 = vmatpush2.msra.mxu0 0.0
    %1053 = vmatprep.subr.mxu0 0.0
    %1054 = vmatpush2.msra.mxu0 0.0
    %1055 = vmatprep.subr.mxu0 0.0
    %1056 = vmatpush2.msra.mxu0 0.0
    %1057 = vmatprep.subr.mxu0 0.0
    %1058 = vmatpush2.msra.mxu0 0.0
    %1059 = vmatprep.subr.mxu0 0.0
    %1060 = vmatpush2.msra.mxu0 0.0
    %1061 = vmatprep.subr.mxu0 0.0
    %1062 = vmatpush2.msra.mxu0 0.0
    %1063 = vmatprep.subr.mxu0 0.0
    %1064 = vmatpush2.msra.mxu0 0.0
    %1065 = vmatprep.mubr.f32.mxu0 0.0
    %1066 = vmatmul.mubr.f32.gmra.mxu0 %v999
    %v1067 = vpop.f32.mrf.mxu0
    %v1068 = vadd.f32 0.0, %v1067
    %v1069 = vpop.f32.mrf.mxu0
    %1070 = vdwg.mxu0
    %v1071 = vld [vmem:[#allocation5 + $0x30] sm:$0xff]
    %v1072 = vld [vmem:[#allocation5 + $0x38] sm:$0xff]
    %v1074 = vsel %vm189, %v1068, 0
    %1076 = vmatprep.subr.mxu0 0.0
    %1077 = vmatpush1.msra.mxu0 0.0
    %1078 = vmatprep.subr.mxu0 0.0
    %1079 = vmatpush1.msra.mxu0 0.0
    %1080 = vmatprep.subr.mxu0 0.0
    %1081 = vmatpush1.msra.mxu0 0.0
    %1082 = vmatprep.subr.mxu0 0.0
    %1083 = vmatpush1.msra.mxu0 0.0
    %1084 = vmatprep.subr.mxu0 0.0
    %1085 = vmatpush1.msra.mxu0 0.0
    %1086 = vmatprep.subr.mxu0 0.0
    %1087 = vmatpush1.msra.mxu0 0.0
    %1088 = vmatprep.subr.mxu0 0.0
    %1089 = vmatpush1.msra.mxu0 0.0
    %1090 = vmatprep.subr.mxu0 0.0
    %1091 = vmatpush1.msra.mxu0 0.0
    %1092 = vmatprep.subr.mxu0 0.0
    %1093 = vmatpush1.msra.mxu0 0.0
    %1094 = vmatprep.subr.mxu0 0.0
    %1095 = vmatpush1.msra.mxu0 0.0
    %1096 = vmatprep.subr.mxu0 0.0
    %1097 = vmatpush1.msra.mxu0 0.0
    %1098 = vmatprep.subr.mxu0 0.0
    %1099 = vmatpush1.msra.mxu0 0.0
    %1100 = vmatprep.subr.mxu0 0.0
    %1101 = vmatpush1.msra.mxu0 0.0
    %1102 = vmatprep.subr.mxu0 0.0
    %1103 = vmatpush1.msra.mxu0 0.0
    %1104 = vmatprep.subr.mxu0 0.0
    %1105 = vmatpush1.msra.mxu0 %v1072
    %1106 = vmatprep.subr.mxu0 0.0
    %1107 = vmatpush1.msra.mxu0 %v1071
    %1108 = vmatprep.subr.mxu0 0.0
    %1109 = vmatpush2.msra.mxu0 0.0
    %1110 = vmatprep.subr.mxu0 0.0
    %1111 = vmatpush2.msra.mxu0 0.0
    %1112 = vmatprep.subr.mxu0 0.0
    %1113 = vmatpush2.msra.mxu0 0.0
    %1114 = vmatprep.subr.mxu0 0.0
    %1115 = vmatpush2.msra.mxu0 0.0
    %1116 = vmatprep.subr.mxu0 0.0
    %1117 = vmatpush2.msra.mxu0 0.0
    %1118 = vmatprep.subr.mxu0 0.0
    %1119 = vmatpush2.msra.mxu0 0.0
    %1120 = vmatprep.subr.mxu0 0.0
    %1121 = vmatpush2.msra.mxu0 0.0
    %1122 = vmatprep.subr.mxu0 0.0
    %1123 = vmatpush2.msra.mxu0 0.0
    %1124 = vmatprep.subr.mxu0 0.0
    %1125 = vmatpush2.msra.mxu0 0.0
    %1126 = vmatprep.subr.mxu0 0.0
    %1127 = vmatpush2.msra.mxu0 0.0
    %1128 = vmatprep.subr.mxu0 0.0
    %1129 = vmatpush2.msra.mxu0 0.0
    %1130 = vmatprep.subr.mxu0 0.0
    %1131 = vmatpush2.msra.mxu0 0.0
    %1132 = vmatprep.subr.mxu0 0.0
    %1133 = vmatpush2.msra.mxu0 0.0
    %1134 = vmatprep.subr.mxu0 0.0
    %1135 = vmatpush2.msra.mxu0 0.0
    %1136 = vmatprep.subr.mxu0 0.0
    %1137 = vmatpush2.msra.mxu0 0.0
    %1138 = vmatprep.subr.mxu0 0.0
    %1139 = vmatpush2.msra.mxu0 0.0
    %1140 = vmatprep.mubr.f32.mxu0 0.0
    %1141 = vmatmul.mubr.f32.gmra.mxu0 %v1074
    %v1142 = vpop.f32.mrf.mxu0
    %v1143 = vadd.f32 0.0, %v1142
    %v1144 = vpop.f32.mrf.mxu0
    %1145 = vdwg.mxu0
    %v1146 = vadd.f32 %v905, %v1143
    %1148 = vrot.lane.b32.xlu0 %v182, 64
    %v1149 = vpop.permute.xlu0 %1148
    %v1150 = vsel %vm189, %v182, 0
    %v1152 = vsel %vm189, %v1149, 0
    %1154 = vmatprep.subr.mxu0 0.0
    %1155 = vmatpush1.xpose.msra.mxu0 0.0
    %1156 = vmatprep.subr.mxu0 0.0
    %1157 = vmatpush1.xpose.msra.mxu0 0.0
    %1158 = vmatprep.subr.mxu0 0.0
    %1159 = vmatpush1.xpose.msra.mxu0 0.0
    %1160 = vmatprep.subr.mxu0 0.0
    %1161 = vmatpush1.xpose.msra.mxu0 0.0
    %1162 = vmatprep.subr.mxu0 0.0
    %1163 = vmatpush1.xpose.msra.mxu0 0.0
    %1164 = vmatprep.subr.mxu0 0.0
    %1165 = vmatpush1.xpose.msra.mxu0 0.0
    %1166 = vmatprep.subr.mxu0 0.0
    %1167 = vmatpush1.xpose.msra.mxu0 0.0
    %1168 = vmatprep.subr.mxu0 0.0
    %1169 = vmatpush1.xpose.msra.mxu0 0.0
    %1170 = vmatprep.subr.mxu0 0.0
    %1171 = vmatpush1.xpose.msra.mxu0 0.0
    %1172 = vmatprep.subr.mxu0 0.0
    %1173 = vmatpush1.xpose.msra.mxu0 0.0
    %1174 = vmatprep.subr.mxu0 0.0
    %1175 = vmatpush1.xpose.msra.mxu0 0.0
    %1176 = vmatprep.subr.mxu0 0.0
    %1177 = vmatpush1.xpose.msra.mxu0 0.0
    %1178 = vmatprep.subr.mxu0 0.0
    %1179 = vmatpush1.xpose.msra.mxu0 0.0
    %1180 = vmatprep.subr.mxu0 0.0
    %1181 = vmatpush1.xpose.msra.mxu0 0.0
    %1182 = vmatprep.subr.mxu0 0.0
    %1183 = vmatpush1.xpose.msra.mxu0 0.0
    %1184 = vmatprep.subr.mxu0 0.0
    %1185 = vmatpush1.xpose.msra.mxu0 %v1152
    %1186 = vmatprep.subr.mxu0 0.0
    %1187 = vmatpush2.xpose.msra.mxu0 0.0
    %1188 = vmatprep.subr.mxu0 0.0
    %1189 = vmatpush2.xpose.msra.mxu0 0.0
    %1190 = vmatprep.subr.mxu0 0.0
    %1191 = vmatpush2.xpose.msra.mxu0 0.0
    %1192 = vmatprep.subr.mxu0 0.0
    %1193 = vmatpush2.xpose.msra.mxu0 0.0
    %1194 = vmatprep.subr.mxu0 0.0
    %1195 = vmatpush2.xpose.msra.mxu0 0.0
    %1196 = vmatprep.subr.mxu0 0.0
    %1197 = vmatpush2.xpose.msra.mxu0 0.0
    %1198 = vmatprep.subr.mxu0 0.0
    %1199 = vmatpush2.xpose.msra.mxu0 0.0
    %1200 = vmatprep.subr.mxu0 0.0
    %1201 = vmatpush2.xpose.msra.mxu0 0.0
    %1202 = vmatprep.subr.mxu0 0.0
    %1203 = vmatpush2.xpose.msra.mxu0 0.0
    %1204 = vmatprep.subr.mxu0 0.0
    %1205 = vmatpush2.xpose.msra.mxu0 0.0
    %1206 = vmatprep.subr.mxu0 0.0
    %1207 = vmatpush2.xpose.msra.mxu0 0.0
    %1208 = vmatprep.subr.mxu0 0.0
    %1209 = vmatpush2.xpose.msra.mxu0 0.0
    %1210 = vmatprep.subr.mxu0 0.0
    %1211 = vmatpush2.xpose.msra.mxu0 0.0
    %1212 = vmatprep.subr.mxu0 0.0
    %1213 = vmatpush2.xpose.msra.mxu0 0.0
    %1214 = vmatprep.subr.mxu0 0.0
    %1215 = vmatpush2.xpose.msra.mxu0 0.0
    %1216 = vmatprep.subr.mxu0 0.0
    %1217 = vmatpush2.xpose.msra.mxu0 0.0
    %1218 = vmatprep.mubr.f32.mxu0 0.0
    %1219 = vmatmul.mubr.f32.gmra.mxu0 %v1150
    %v1220 = vpop.f32.mrf.mxu0
    %v1221 = vadd.f32 0.0, %v1220
    %v1222 = vpop.f32.mrf.mxu0
    %1223 = vdwg.mxu0
    %v1224 = vsel %vm264, %v1221, -inf
    %1225 = vmax.xlane.f32.xlu0 %v1224
    %v1226 = vpop.xlane.xlu0 %1225
    %v1227 = vsub.f32 %v1221, %v1226
    %v1228 = vmul.f32 %v1227, 1.442695
    %v1229 = vpow.pop %v1228
    %v1230 = vsel %vm264, %v1229, 0.0
    %1231 = vadd.xlane.f32.xlu0 %v1230
    %v1232 = vpop.xlane.xlu0 %1231
    %v1233 = vrcp.pop %v1232
    %v1234 = vmul.f32 %v1229, %v1233
    %v1236 = vsel %vm264, %v1234, 0
    %1238 = vmatprep.subr.mxu0 0.0
    %1239 = vmatpush1.msra.mxu0 0.0
    %1240 = vmatprep.subr.mxu0 0.0
    %1241 = vmatpush1.msra.mxu0 0.0
    %1242 = vmatprep.subr.mxu0 0.0
    %1243 = vmatpush1.msra.mxu0 0.0
    %1244 = vmatprep.subr.mxu0 0.0
    %1245 = vmatpush1.msra.mxu0 0.0
    %1246 = vmatprep.subr.mxu0 0.0
    %1247 = vmatpush1.msra.mxu0 0.0
    %1248 = vmatprep.subr.mxu0 0.0
    %1249 = vmatpush1.msra.mxu0 0.0
    %1250 = vmatprep.subr.mxu0 0.0
    %1251 = vmatpush1.msra.mxu0 0.0
    %1252 = vmatprep.subr.mxu0 0.0
    %1253 = vmatpush1.msra.mxu0 0.0
    %1254 = vmatprep.subr.mxu0 0.0
    %1255 = vmatpush1.msra.mxu0 0.0
    %1256 = vmatprep.subr.mxu0 0.0
    %1257 = vmatpush1.msra.mxu0 0.0
    %1258 = vmatprep.subr.mxu0 0.0
    %1259 = vmatpush1.msra.mxu0 0.0
    %1260 = vmatprep.subr.mxu0 0.0
    %1261 = vmatpush1.msra.mxu0 0.0
    %1262 = vmatprep.subr.mxu0 0.0
    %1263 = vmatpush1.msra.mxu0 0.0
    %1264 = vmatprep.subr.mxu0 0.0
    %1265 = vmatpush1.msra.mxu0 0.0
    %1266 = vmatprep.subr.mxu0 0.0
    %1267 = vmatpush1.msra.mxu0 0.0
    %1268 = vmatprep.subr.mxu0 0.0
    %1269 = vmatpush1.msra.mxu0 %v184
    %1270 = vmatprep.subr.mxu0 0.0
    %1271 = vmatpush2.msra.mxu0 0.0
    %1272 = vmatprep.subr.mxu0 0.0
    %1273 = vmatpush2.msra.mxu0 0.0
    %1274 = vmatprep.subr.mxu0 0.0
    %1275 = vmatpush2.msra.mxu0 0.0
    %1276 = vmatprep.subr.mxu0 0.0
    %1277 = vmatpush2.msra.mxu0 0.0
    %1278 = vmatprep.subr.mxu0 0.0
    %1279 = vmatpush2.msra.mxu0 0.0
    %1280 = vmatprep.subr.mxu0 0.0
    %1281 = vmatpush2.msra.mxu0 0.0
    %1282 = vmatprep.subr.mxu0 0.0
    %1283 = vmatpush2.msra.mxu0 0.0
    %1284 = vmatprep.subr.mxu0 0.0
    %1285 = vmatpush2.msra.mxu0 0.0
    %1286 = vmatprep.subr.mxu0 0.0
    %1287 = vmatpush2.msra.mxu0 0.0
    %1288 = vmatprep.subr.mxu0 0.0
    %1289 = vmatpush2.msra.mxu0 0.0
    %1290 = vmatprep.subr.mxu0 0.0
    %1291 = vmatpush2.msra.mxu0 0.0
    %1292 = vmatprep.subr.mxu0 0.0
    %1293 = vmatpush2.msra.mxu0 0.0
    %1294 = vmatprep.subr.mxu0 0.0
    %1295 = vmatpush2.msra.mxu0 0.0
    %1296 = vmatprep.subr.mxu0 0.0
    %1297 = vmatpush2.msra.mxu0 0.0
    %1298 = vmatprep.subr.mxu0 0.0
    %1299 = vmatpush2.msra.mxu0 0.0
    %1300 = vmatprep.subr.mxu0 0.0
    %1301 = vmatpush2.msra.mxu0 0.0
    %1302 = vmatprep.mubr.f32.mxu0 0.0
    %1303 = vmatmul.mubr.f32.gmra.mxu0 %v1236
    %v1304 = vpop.f32.mrf.mxu0
    %v1305 = vadd.f32 0.0, %v1304
    %v1306 = vpop.f32.mrf.mxu0
    %1307 = vdwg.mxu0
    %1308 = vrot.lane.b32.xlu0 %v182, 112
    %v1309 = vpop.permute.xlu0 %1308
    %1310 = vrot.lane.b32.xlu0 %v182, 48
    %v1311 = vpop.permute.xlu0 %1310
    %v1312 = vsel %vm189, %v1309, 0
    %v1314 = vsel %vm189, %v1311, 0
    %1316 = vmatprep.subr.mxu0 0.0
    %1317 = vmatpush1.xpose.msra.mxu0 0.0
    %1318 = vmatprep.subr.mxu0 0.0
    %1319 = vmatpush1.xpose.msra.mxu0 0.0
    %1320 = vmatprep.subr.mxu0 0.0
    %1321 = vmatpush1.xpose.msra.mxu0 0.0
    %1322 = vmatprep.subr.mxu0 0.0
    %1323 = vmatpush1.xpose.msra.mxu0 0.0
    %1324 = vmatprep.subr.mxu0 0.0
    %1325 = vmatpush1.xpose.msra.mxu0 0.0
    %1326 = vmatprep.subr.mxu0 0.0
    %1327 = vmatpush1.xpose.msra.mxu0 0.0
    %1328 = vmatprep.subr.mxu0 0.0
    %1329 = vmatpush1.xpose.msra.mxu0 0.0
    %1330 = vmatprep.subr.mxu0 0.0
    %1331 = vmatpush1.xpose.msra.mxu0 0.0
    %1332 = vmatprep.subr.mxu0 0.0
    %1333 = vmatpush1.xpose.msra.mxu0 0.0
    %1334 = vmatprep.subr.mxu0 0.0
    %1335 = vmatpush1.xpose.msra.mxu0 0.0
    %1336 = vmatprep.subr.mxu0 0.0
    %1337 = vmatpush1.xpose.msra.mxu0 0.0
    %1338 = vmatprep.subr.mxu0 0.0
    %1339 = vmatpush1.xpose.msra.mxu0 0.0
    %1340 = vmatprep.subr.mxu0 0.0
    %1341 = vmatpush1.xpose.msra.mxu0 0.0
    %1342 = vmatprep.subr.mxu0 0.0
    %1343 = vmatpush1.xpose.msra.mxu0 0.0
    %1344 = vmatprep.subr.mxu0 0.0
    %1345 = vmatpush1.xpose.msra.mxu0 0.0
    %1346 = vmatprep.subr.mxu0 0.0
    %1347 = vmatpush1.xpose.msra.mxu0 %v1314
    %1348 = vmatprep.subr.mxu0 0.0
    %1349 = vmatpush2.xpose.msra.mxu0 0.0
    %1350 = vmatprep.subr.mxu0 0.0
    %1351 = vmatpush2.xpose.msra.mxu0 0.0
    %1352 = vmatprep.subr.mxu0 0.0
    %1353 = vmatpush2.xpose.msra.mxu0 0.0
    %1354 = vmatprep.subr.mxu0 0.0
    %1355 = vmatpush2.xpose.msra.mxu0 0.0
    %1356 = vmatprep.subr.mxu0 0.0
    %1357 = vmatpush2.xpose.msra.mxu0 0.0
    %1358 = vmatprep.subr.mxu0 0.0
    %1359 = vmatpush2.xpose.msra.mxu0 0.0
    %1360 = vmatprep.subr.mxu0 0.0
    %1361 = vmatpush2.xpose.msra.mxu0 0.0
    %1362 = vmatprep.subr.mxu0 0.0
    %1363 = vmatpush2.xpose.msra.mxu0 0.0
    %1364 = vmatprep.subr.mxu0 0.0
    %1365 = vmatpush2.xpose.msra.mxu0 0.0
    %1366 = vmatprep.subr.mxu0 0.0
    %1367 = vmatpush2.xpose.msra.mxu0 0.0
    %1368 = vmatprep.subr.mxu0 0.0
    %1369 = vmatpush2.xpose.msra.mxu0 0.0
    %1370 = vmatprep.subr.mxu0 0.0
    %1371 = vmatpush2.xpose.msra.mxu0 0.0
    %1372 = vmatprep.subr.mxu0 0.0
    %1373 = vmatpush2.xpose.msra.mxu0 0.0
    %1374 = vmatprep.subr.mxu0 0.0
    %1375 = vmatpush2.xpose.msra.mxu0 0.0
    %1376 = vmatprep.subr.mxu0 0.0
    %1377 = vmatpush2.xpose.msra.mxu0 0.0
    %1378 = vmatprep.subr.mxu0 0.0
    %1379 = vmatpush2.xpose.msra.mxu0 0.0
    %1380 = vmatprep.mubr.f32.mxu0 0.0
    %1381 = vmatmul.mubr.f32.gmra.mxu0 %v1312
    %v1382 = vpop.f32.mrf.mxu0
    %v1383 = vadd.f32 0.0, %v1382
    %v1384 = vpop.f32.mrf.mxu0
    %1385 = vdwg.mxu0
    %v1386 = vsel %vm264, %v1383, -inf
    %1387 = vmax.xlane.f32.xlu0 %v1386
    %v1388 = vpop.xlane.xlu0 %1387
    %v1389 = vsub.f32 %v1383, %v1388
    %v1390 = vmul.f32 %v1389, 1.442695
    %v1391 = vpow.pop %v1390
    %v1392 = vsel %vm264, %v1391, 0.0
    %1393 = vadd.xlane.f32.xlu0 %v1392
    %v1394 = vpop.xlane.xlu0 %1393
    %v1395 = vrcp.pop %v1394
    %v1396 = vmul.f32 %v1391, %v1395
    %1398 = vrot.lane.b32.xlu0 %v184, 112
    %v1399 = vpop.permute.xlu0 %1398
    %v1402 = vsel %vm264, %v1396, 0
    %1404 = vmatprep.subr.mxu0 0.0
    %1405 = vmatpush1.msra.mxu0 0.0
    %1406 = vmatprep.subr.mxu0 0.0
    %1407 = vmatpush1.msra.mxu0 0.0
    %1408 = vmatprep.subr.mxu0 0.0
    %1409 = vmatpush1.msra.mxu0 0.0
    %1410 = vmatprep.subr.mxu0 0.0
    %1411 = vmatpush1.msra.mxu0 0.0
    %1412 = vmatprep.subr.mxu0 0.0
    %1413 = vmatpush1.msra.mxu0 0.0
    %1414 = vmatprep.subr.mxu0 0.0
    %1415 = vmatpush1.msra.mxu0 0.0
    %1416 = vmatprep.subr.mxu0 0.0
    %1417 = vmatpush1.msra.mxu0 0.0
    %1418 = vmatprep.subr.mxu0 0.0
    %1419 = vmatpush1.msra.mxu0 0.0
    %1420 = vmatprep.subr.mxu0 0.0
    %1421 = vmatpush1.msra.mxu0 0.0
    %1422 = vmatprep.subr.mxu0 0.0
    %1423 = vmatpush1.msra.mxu0 0.0
    %1424 = vmatprep.subr.mxu0 0.0
    %1425 = vmatpush1.msra.mxu0 0.0
    %1426 = vmatprep.subr.mxu0 0.0
    %1427 = vmatpush1.msra.mxu0 0.0
    %1428 = vmatprep.subr.mxu0 0.0
    %1429 = vmatpush1.msra.mxu0 0.0
    %1430 = vmatprep.subr.mxu0 0.0
    %1431 = vmatpush1.msra.mxu0 0.0
    %1432 = vmatprep.subr.mxu0 0.0
    %1433 = vmatpush1.msra.mxu0 0.0
    %1434 = vmatprep.subr.mxu0 0.0
    %1435 = vmatpush1.msra.mxu0 %v1399
    %1436 = vmatprep.subr.mxu0 0.0
    %1437 = vmatpush2.msra.mxu0 0.0
    %1438 = vmatprep.subr.mxu0 0.0
    %1439 = vmatpush2.msra.mxu0 0.0
    %1440 = vmatprep.subr.mxu0 0.0
    %1441 = vmatpush2.msra.mxu0 0.0
    %1442 = vmatprep.subr.mxu0 0.0
    %1443 = vmatpush2.msra.mxu0 0.0
    %1444 = vmatprep.subr.mxu0 0.0
    %1445 = vmatpush2.msra.mxu0 0.0
    %1446 = vmatprep.subr.mxu0 0.0
    %1447 = vmatpush2.msra.mxu0 0.0
    %1448 = vmatprep.subr.mxu0 0.0
    %1449 = vmatpush2.msra.mxu0 0.0
    %1450 = vmatprep.subr.mxu0 0.0
    %1451 = vmatpush2.msra.mxu0 0.0
    %1452 = vmatprep.subr.mxu0 0.0
    %1453 = vmatpush2.msra.mxu0 0.0
    %1454 = vmatprep.subr.mxu0 0.0
    %1455 = vmatpush2.msra.mxu0 0.0
    %1456 = vmatprep.subr.mxu0 0.0
    %1457 = vmatpush2.msra.mxu0 0.0
    %1458 = vmatprep.subr.mxu0 0.0
    %1459 = vmatpush2.msra.mxu0 0.0
    %1460 = vmatprep.subr.mxu0 0.0
    %1461 = vmatpush2.msra.mxu0 0.0
    %1462 = vmatprep.subr.mxu0 0.0
    %1463 = vmatpush2.msra.mxu0 0.0
    %1464 = vmatprep.subr.mxu0 0.0
    %1465 = vmatpush2.msra.mxu0 0.0
    %1466 = vmatprep.subr.mxu0 0.0
    %1467 = vmatpush2.msra.mxu0 0.0
    %1468 = vmatprep.mubr.f32.mxu0 0.0
    %1469 = vmatmul.mubr.f32.gmra.mxu0 %v1402
    %v1470 = vpop.f32.mrf.mxu0
    %v1471 = vadd.f32 0.0, %v1470
    %v1472 = vpop.f32.mrf.mxu0
    %1473 = vdwg.mxu0
    %v1475 = vsel %vm189, %v1471, 0
    %1477 = vmatprep.subr.mxu0 0.0
    %1478 = vmatpush1.msra.mxu0 0.0
    %1479 = vmatprep.subr.mxu0 0.0
    %1480 = vmatpush1.msra.mxu0 0.0
    %1481 = vmatprep.subr.mxu0 0.0
    %1482 = vmatpush1.msra.mxu0 0.0
    %1483 = vmatprep.subr.mxu0 0.0
    %1484 = vmatpush1.msra.mxu0 0.0
    %1485 = vmatprep.subr.mxu0 0.0
    %1486 = vmatpush1.msra.mxu0 0.0
    %1487 = vmatprep.subr.mxu0 0.0
    %1488 = vmatpush1.msra.mxu0 0.0
    %1489 = vmatprep.subr.mxu0 0.0
    %1490 = vmatpush1.msra.mxu0 0.0
    %1491 = vmatprep.subr.mxu0 0.0
    %1492 = vmatpush1.msra.mxu0 0.0
    %1493 = vmatprep.subr.mxu0 0.0
    %1494 = vmatpush1.msra.mxu0 0.0
    %1495 = vmatprep.subr.mxu0 0.0
    %1496 = vmatpush1.msra.mxu0 0.0
    %1497 = vmatprep.subr.mxu0 0.0
    %1498 = vmatpush1.msra.mxu0 0.0
    %1499 = vmatprep.subr.mxu0 0.0
    %1500 = vmatpush1.msra.mxu0 0.0
    %1501 = vmatprep.subr.mxu0 0.0
    %1502 = vmatpush1.msra.mxu0 0.0
    %1503 = vmatprep.subr.mxu0 0.0
    %1504 = vmatpush1.msra.mxu0 0.0
    %1505 = vmatprep.subr.mxu0 0.0
    %1506 = vmatpush1.msra.mxu0 %v518
    %1507 = vmatprep.subr.mxu0 0.0
    %1508 = vmatpush1.msra.mxu0 %v517
    %1509 = vmatprep.subr.mxu0 0.0
    %1510 = vmatpush2.msra.mxu0 0.0
    %1511 = vmatprep.subr.mxu0 0.0
    %1512 = vmatpush2.msra.mxu0 0.0
    %1513 = vmatprep.subr.mxu0 0.0
    %1514 = vmatpush2.msra.mxu0 0.0
    %1515 = vmatprep.subr.mxu0 0.0
    %1516 = vmatpush2.msra.mxu0 0.0
    %1517 = vmatprep.subr.mxu0 0.0
    %1518 = vmatpush2.msra.mxu0 0.0
    %1519 = vmatprep.subr.mxu0 0.0
    %1520 = vmatpush2.msra.mxu0 0.0
    %1521 = vmatprep.subr.mxu0 0.0
    %1522 = vmatpush2.msra.mxu0 0.0
    %1523 = vmatprep.subr.mxu0 0.0
    %1524 = vmatpush2.msra.mxu0 0.0
    %1525 = vmatprep.subr.mxu0 0.0
    %1526 = vmatpush2.msra.mxu0 0.0
    %1527 = vmatprep.subr.mxu0 0.0
    %1528 = vmatpush2.msra.mxu0 0.0
    %1529 = vmatprep.subr.mxu0 0.0
    %1530 = vmatpush2.msra.mxu0 0.0
    %1531 = vmatprep.subr.mxu0 0.0
    %1532 = vmatpush2.msra.mxu0 0.0
    %1533 = vmatprep.subr.mxu0 0.0
    %1534 = vmatpush2.msra.mxu0 0.0
    %1535 = vmatprep.subr.mxu0 0.0
    %1536 = vmatpush2.msra.mxu0 0.0
    %1537 = vmatprep.subr.mxu0 0.0
    %1538 = vmatpush2.msra.mxu0 0.0
    %1539 = vmatprep.subr.mxu0 0.0
    %1540 = vmatpush2.msra.mxu0 0.0
    %1541 = vmatprep.mubr.f32.mxu0 0.0
    %1542 = vmatmul.mubr.f32.gmra.mxu0 %v1475
    %v1543 = vpop.f32.mrf.mxu0
    %v1544 = vadd.f32 0.0, %v1543
    %v1545 = vpop.f32.mrf.mxu0
    %1546 = vdwg.mxu0
    %v1548 = vsel %vm189, %v1305, 0
    %1550 = vmatprep.subr.mxu0 0.0
    %1551 = vmatpush1.msra.mxu0 0.0
    %1552 = vmatprep.subr.mxu0 0.0
    %1553 = vmatpush1.msra.mxu0 0.0
    %1554 = vmatprep.subr.mxu0 0.0
    %1555 = vmatpush1.msra.mxu0 0.0
    %1556 = vmatprep.subr.mxu0 0.0
    %1557 = vmatpush1.msra.mxu0 0.0
    %1558 = vmatprep.subr.mxu0 0.0
    %1559 = vmatpush1.msra.mxu0 0.0
    %1560 = vmatprep.subr.mxu0 0.0
    %1561 = vmatpush1.msra.mxu0 0.0
    %1562 = vmatprep.subr.mxu0 0.0
    %1563 = vmatpush1.msra.mxu0 0.0
    %1564 = vmatprep.subr.mxu0 0.0
    %1565 = vmatpush1.msra.mxu0 0.0
    %1566 = vmatprep.subr.mxu0 0.0
    %1567 = vmatpush1.msra.mxu0 0.0
    %1568 = vmatprep.subr.mxu0 0.0
    %1569 = vmatpush1.msra.mxu0 0.0
    %1570 = vmatprep.subr.mxu0 0.0
    %1571 = vmatpush1.msra.mxu0 0.0
    %1572 = vmatprep.subr.mxu0 0.0
    %1573 = vmatpush1.msra.mxu0 0.0
    %1574 = vmatprep.subr.mxu0 0.0
    %1575 = vmatpush1.msra.mxu0 0.0
    %1576 = vmatprep.subr.mxu0 0.0
    %1577 = vmatpush1.msra.mxu0 0.0
    %1578 = vmatprep.subr.mxu0 0.0
    %1579 = vmatpush1.msra.mxu0 %v350
    %1580 = vmatprep.subr.mxu0 0.0
    %1581 = vmatpush1.msra.mxu0 %v349
    %1582 = vmatprep.subr.mxu0 0.0
    %1583 = vmatpush2.msra.mxu0 0.0
    %1584 = vmatprep.subr.mxu0 0.0
    %1585 = vmatpush2.msra.mxu0 0.0
    %1586 = vmatprep.subr.mxu0 0.0
    %1587 = vmatpush2.msra.mxu0 0.0
    %1588 = vmatprep.subr.mxu0 0.0
    %1589 = vmatpush2.msra.mxu0 0.0
    %1590 = vmatprep.subr.mxu0 0.0
    %1591 = vmatpush2.msra.mxu0 0.0
    %1592 = vmatprep.subr.mxu0 0.0
    %1593 = vmatpush2.msra.mxu0 0.0
    %1594 = vmatprep.subr.mxu0 0.0
    %1595 = vmatpush2.msra.mxu0 0.0
    %1596 = vmatprep.subr.mxu0 0.0
    %1597 = vmatpush2.msra.mxu0 0.0
    %1598 = vmatprep.subr.mxu0 0.0
    %1599 = vmatpush2.msra.mxu0 0.0
    %1600 = vmatprep.subr.mxu0 0.0
    %1601 = vmatpush2.msra.mxu0 0.0
    %1602 = vmatprep.subr.mxu0 0.0
    %1603 = vmatpush2.msra.mxu0 0.0
    %1604 = vmatprep.subr.mxu0 0.0
    %1605 = vmatpush2.msra.mxu0 0.0
    %1606 = vmatprep.subr.mxu0 0.0
    %1607 = vmatpush2.msra.mxu0 0.0
    %1608 = vmatprep.subr.mxu0 0.0
    %1609 = vmatpush2.msra.mxu0 0.0
    %1610 = vmatprep.subr.mxu0 0.0
    %1611 = vmatpush2.msra.mxu0 0.0
    %1612 = vmatprep.subr.mxu0 0.0
    %1613 = vmatpush2.msra.mxu0 0.0
    %1614 = vmatprep.mubr.f32.mxu0 0.0
    %1615 = vmatmul.mubr.f32.gmra.mxu0 %v1548
    %v1616 = vpop.f32.mrf.mxu0
    %v1617 = vadd.f32 %v1544, %v1616
    %v1618 = vpop.f32.mrf.mxu0
    %1619 = vdwg.mxu0
    %1620 = vrot.lane.b32.xlu0 %v182, 96
    %v1621 = vpop.permute.xlu0 %1620
    %1622 = vrot.lane.b32.xlu0 %v182, 32
    %v1623 = vpop.permute.xlu0 %1622
    %v1624 = vsel %vm189, %v1621, 0
    %v1626 = vsel %vm189, %v1623, 0
    %1628 = vmatprep.subr.mxu0 0.0
    %1629 = vmatpush1.xpose.msra.mxu0 0.0
    %1630 = vmatprep.subr.mxu0 0.0
    %1631 = vmatpush1.xpose.msra.mxu0 0.0
    %1632 = vmatprep.subr.mxu0 0.0
    %1633 = vmatpush1.xpose.msra.mxu0 0.0
    %1634 = vmatprep.subr.mxu0 0.0
    %1635 = vmatpush1.xpose.msra.mxu0 0.0
    %1636 = vmatprep.subr.mxu0 0.0
    %1637 = vmatpush1.xpose.msra.mxu0 0.0
    %1638 = vmatprep.subr.mxu0 0.0
    %1639 = vmatpush1.xpose.msra.mxu0 0.0
    %1640 = vmatprep.subr.mxu0 0.0
    %1641 = vmatpush1.xpose.msra.mxu0 0.0
    %1642 = vmatprep.subr.mxu0 0.0
    %1643 = vmatpush1.xpose.msra.mxu0 0.0
    %1644 = vmatprep.subr.mxu0 0.0
    %1645 = vmatpush1.xpose.msra.mxu0 0.0
    %1646 = vmatprep.subr.mxu0 0.0
    %1647 = vmatpush1.xpose.msra.mxu0 0.0
    %1648 = vmatprep.subr.mxu0 0.0
    %1649 = vmatpush1.xpose.msra.mxu0 0.0
    %1650 = vmatprep.subr.mxu0 0.0
    %1651 = vmatpush1.xpose.msra.mxu0 0.0
    %1652 = vmatprep.subr.mxu0 0.0
    %1653 = vmatpush1.xpose.msra.mxu0 0.0
    %1654 = vmatprep.subr.mxu0 0.0
    %1655 = vmatpush1.xpose.msra.mxu0 0.0
    %1656 = vmatprep.subr.mxu0 0.0
    %1657 = vmatpush1.xpose.msra.mxu0 0.0
    %1658 = vmatprep.subr.mxu0 0.0
    %1659 = vmatpush1.xpose.msra.mxu0 %v1626
    %1660 = vmatprep.subr.mxu0 0.0
    %1661 = vmatpush2.xpose.msra.mxu0 0.0
    %1662 = vmatprep.subr.mxu0 0.0
    %1663 = vmatpush2.xpose.msra.mxu0 0.0
    %1664 = vmatprep.subr.mxu0 0.0
    %1665 = vmatpush2.xpose.msra.mxu0 0.0
    %1666 = vmatprep.subr.mxu0 0.0
    %1667 = vmatpush2.xpose.msra.mxu0 0.0
    %1668 = vmatprep.subr.mxu0 0.0
    %1669 = vmatpush2.xpose.msra.mxu0 0.0
    %1670 = vmatprep.subr.mxu0 0.0
    %1671 = vmatpush2.xpose.msra.mxu0 0.0
    %1672 = vmatprep.subr.mxu0 0.0
    %1673 = vmatpush2.xpose.msra.mxu0 0.0
    %1674 = vmatprep.subr.mxu0 0.0
    %1675 = vmatpush2.xpose.msra.mxu0 0.0
    %1676 = vmatprep.subr.mxu0 0.0
    %1677 = vmatpush2.xpose.msra.mxu0 0.0
    %1678 = vmatprep.subr.mxu0 0.0
    %1679 = vmatpush2.xpose.msra.mxu0 0.0
    %1680 = vmatprep.subr.mxu0 0.0
    %1681 = vmatpush2.xpose.msra.mxu0 0.0
    %1682 = vmatprep.subr.mxu0 0.0
    %1683 = vmatpush2.xpose.msra.mxu0 0.0
    %1684 = vmatprep.subr.mxu0 0.0
    %1685 = vmatpush2.xpose.msra.mxu0 0.0
    %1686 = vmatprep.subr.mxu0 0.0
    %1687 = vmatpush2.xpose.msra.mxu0 0.0
    %1688 = vmatprep.subr.mxu0 0.0
    %1689 = vmatpush2.xpose.msra.mxu0 0.0
    %1690 = vmatprep.subr.mxu0 0.0
    %1691 = vmatpush2.xpose.msra.mxu0 0.0
    %1692 = vmatprep.mubr.f32.mxu0 0.0
    %1693 = vmatmul.mubr.f32.gmra.mxu0 %v1624
    %v1694 = vpop.f32.mrf.mxu0
    %v1695 = vadd.f32 0.0, %v1694
    %v1696 = vpop.f32.mrf.mxu0
    %1697 = vdwg.mxu0
    %v1698 = vsel %vm264, %v1695, -inf
    %1699 = vmax.xlane.f32.xlu0 %v1698
    %v1700 = vpop.xlane.xlu0 %1699
    %v1701 = vsub.f32 %v1695, %v1700
    %v1702 = vmul.f32 %v1701, 1.442695
    %v1703 = vpow.pop %v1702
    %v1704 = vsel %vm264, %v1703, 0.0
    %1705 = vadd.xlane.f32.xlu0 %v1704
    %v1706 = vpop.xlane.xlu0 %1705
    %v1707 = vrcp.pop %v1706
    %v1708 = vmul.f32 %v1703, %v1707
    %1709 = vrot.lane.b32.xlu0 %v184, 96
    %v1710 = vpop.permute.xlu0 %1709
    %v1713 = vsel %vm264, %v1708, 0
    %1715 = vmatprep.subr.mxu0 0.0
    %1716 = vmatpush1.msra.mxu0 0.0
    %1717 = vmatprep.subr.mxu0 0.0
    %1718 = vmatpush1.msra.mxu0 0.0
    %1719 = vmatprep.subr.mxu0 0.0
    %1720 = vmatpush1.msra.mxu0 0.0
    %1721 = vmatprep.subr.mxu0 0.0
    %1722 = vmatpush1.msra.mxu0 0.0
    %1723 = vmatprep.subr.mxu0 0.0
    %1724 = vmatpush1.msra.mxu0 0.0
    %1725 = vmatprep.subr.mxu0 0.0
    %1726 = vmatpush1.msra.mxu0 0.0
    %1727 = vmatprep.subr.mxu0 0.0
    %1728 = vmatpush1.msra.mxu0 0.0
    %1729 = vmatprep.subr.mxu0 0.0
    %1730 = vmatpush1.msra.mxu0 0.0
    %1731 = vmatprep.subr.mxu0 0.0
    %1732 = vmatpush1.msra.mxu0 0.0
    %1733 = vmatprep.subr.mxu0 0.0
    %1734 = vmatpush1.msra.mxu0 0.0
    %1735 = vmatprep.subr.mxu0 0.0
    %1736 = vmatpush1.msra.mxu0 0.0
    %1737 = vmatprep.subr.mxu0 0.0
    %1738 = vmatpush1.msra.mxu0 0.0
    %1739 = vmatprep.subr.mxu0 0.0
    %1740 = vmatpush1.msra.mxu0 0.0
    %1741 = vmatprep.subr.mxu0 0.0
    %1742 = vmatpush1.msra.mxu0 0.0
    %1743 = vmatprep.subr.mxu0 0.0
    %1744 = vmatpush1.msra.mxu0 0.0
    %1745 = vmatprep.subr.mxu0 0.0
    %1746 = vmatpush1.msra.mxu0 %v1710
    %1747 = vmatprep.subr.mxu0 0.0
    %1748 = vmatpush2.msra.mxu0 0.0
    %1749 = vmatprep.subr.mxu0 0.0
    %1750 = vmatpush2.msra.mxu0 0.0
    %1751 = vmatprep.subr.mxu0 0.0
    %1752 = vmatpush2.msra.mxu0 0.0
    %1753 = vmatprep.subr.mxu0 0.0
    %1754 = vmatpush2.msra.mxu0 0.0
    %1755 = vmatprep.subr.mxu0 0.0
    %1756 = vmatpush2.msra.mxu0 0.0
    %1757 = vmatprep.subr.mxu0 0.0
    %1758 = vmatpush2.msra.mxu0 0.0
    %1759 = vmatprep.subr.mxu0 0.0
    %1760 = vmatpush2.msra.mxu0 0.0
    %1761 = vmatprep.subr.mxu0 0.0
    %1762 = vmatpush2.msra.mxu0 0.0
    %1763 = vmatprep.subr.mxu0 0.0
    %1764 = vmatpush2.msra.mxu0 0.0
    %1765 = vmatprep.subr.mxu0 0.0
    %1766 = vmatpush2.msra.mxu0 0.0
    %1767 = vmatprep.subr.mxu0 0.0
    %1768 = vmatpush2.msra.mxu0 0.0
    %1769 = vmatprep.subr.mxu0 0.0
    %1770 = vmatpush2.msra.mxu0 0.0
    %1771 = vmatprep.subr.mxu0 0.0
    %1772 = vmatpush2.msra.mxu0 0.0
    %1773 = vmatprep.subr.mxu0 0.0
    %1774 = vmatpush2.msra.mxu0 0.0
    %1775 = vmatprep.subr.mxu0 0.0
    %1776 = vmatpush2.msra.mxu0 0.0
    %1777 = vmatprep.subr.mxu0 0.0
    %1778 = vmatpush2.msra.mxu0 0.0
    %1779 = vmatprep.mubr.f32.mxu0 0.0
    %1780 = vmatmul.mubr.f32.gmra.mxu0 %v1713
    %v1781 = vpop.f32.mrf.mxu0
    %v1782 = vadd.f32 0.0, %v1781
    %v1783 = vpop.f32.mrf.mxu0
    %1784 = vdwg.mxu0
    %v1786 = vsel %vm189, %v1782, 0
    %1788 = vmatprep.subr.mxu0 0.0
    %1789 = vmatpush1.msra.mxu0 0.0
    %1790 = vmatprep.subr.mxu0 0.0
    %1791 = vmatpush1.msra.mxu0 0.0
    %1792 = vmatprep.subr.mxu0 0.0
    %1793 = vmatpush1.msra.mxu0 0.0
    %1794 = vmatprep.subr.mxu0 0.0
    %1795 = vmatpush1.msra.mxu0 0.0
    %1796 = vmatprep.subr.mxu0 0.0
    %1797 = vmatpush1.msra.mxu0 0.0
    %1798 = vmatprep.subr.mxu0 0.0
    %1799 = vmatpush1.msra.mxu0 0.0
    %1800 = vmatprep.subr.mxu0 0.0
    %1801 = vmatpush1.msra.mxu0 0.0
    %1802 = vmatprep.subr.mxu0 0.0
    %1803 = vmatpush1.msra.mxu0 0.0
    %1804 = vmatprep.subr.mxu0 0.0
    %1805 = vmatpush1.msra.mxu0 0.0
    %1806 = vmatprep.subr.mxu0 0.0
    %1807 = vmatpush1.msra.mxu0 0.0
    %1808 = vmatprep.subr.mxu0 0.0
    %1809 = vmatpush1.msra.mxu0 0.0
    %1810 = vmatprep.subr.mxu0 0.0
    %1811 = vmatpush1.msra.mxu0 0.0
    %1812 = vmatprep.subr.mxu0 0.0
    %1813 = vmatpush1.msra.mxu0 0.0
    %1814 = vmatprep.subr.mxu0 0.0
    %1815 = vmatpush1.msra.mxu0 0.0
    %1816 = vmatprep.subr.mxu0 0.0
    %1817 = vmatpush1.msra.mxu0 %v831
    %1818 = vmatprep.subr.mxu0 0.0
    %1819 = vmatpush1.msra.mxu0 %v830
    %1820 = vmatprep.subr.mxu0 0.0
    %1821 = vmatpush2.msra.mxu0 0.0
    %1822 = vmatprep.subr.mxu0 0.0
    %1823 = vmatpush2.msra.mxu0 0.0
    %1824 = vmatprep.subr.mxu0 0.0
    %1825 = vmatpush2.msra.mxu0 0.0
    %1826 = vmatprep.subr.mxu0 0.0
    %1827 = vmatpush2.msra.mxu0 0.0
    %1828 = vmatprep.subr.mxu0 0.0
    %1829 = vmatpush2.msra.mxu0 0.0
    %1830 = vmatprep.subr.mxu0 0.0
    %1831 = vmatpush2.msra.mxu0 0.0
    %1832 = vmatprep.subr.mxu0 0.0
    %1833 = vmatpush2.msra.mxu0 0.0
    %1834 = vmatprep.subr.mxu0 0.0
    %1835 = vmatpush2.msra.mxu0 0.0
    %1836 = vmatprep.subr.mxu0 0.0
    %1837 = vmatpush2.msra.mxu0 0.0
    %1838 = vmatprep.subr.mxu0 0.0
    %1839 = vmatpush2.msra.mxu0 0.0
    %1840 = vmatprep.subr.mxu0 0.0
    %1841 = vmatpush2.msra.mxu0 0.0
    %1842 = vmatprep.subr.mxu0 0.0
    %1843 = vmatpush2.msra.mxu0 0.0
    %1844 = vmatprep.subr.mxu0 0.0
    %1845 = vmatpush2.msra.mxu0 0.0
    %1846 = vmatprep.subr.mxu0 0.0
    %1847 = vmatpush2.msra.mxu0 0.0
    %1848 = vmatprep.subr.mxu0 0.0
    %1849 = vmatpush2.msra.mxu0 0.0
    %1850 = vmatprep.subr.mxu0 0.0
    %1851 = vmatpush2.msra.mxu0 0.0
    %1852 = vmatprep.mubr.f32.mxu0 0.0
    %1853 = vmatmul.mubr.f32.gmra.mxu0 %v1786
    %v1854 = vpop.f32.mrf.mxu0
    %v1855 = vadd.f32 0.0, %v1854
    %v1856 = vpop.f32.mrf.mxu0
    %1857 = vdwg.mxu0
    %v1858 = vadd.f32 %v1617, %v1855
    %1859 = vrot.lane.b32.xlu0 %v182, 80
    %v1860 = vpop.permute.xlu0 %1859
    %1861 = vrot.lane.b32.xlu0 %v182, 16
    %v1862 = vpop.permute.xlu0 %1861
    %v1863 = vsel %vm189, %v1860, 0
    %v1865 = vsel %vm189, %v1862, 0
    %1867 = vmatprep.subr.mxu0 0.0
    %1868 = vmatpush1.xpose.msra.mxu0 0.0
    %1869 = vmatprep.subr.mxu0 0.0
    %1870 = vmatpush1.xpose.msra.mxu0 0.0
    %1871 = vmatprep.subr.mxu0 0.0
    %1872 = vmatpush1.xpose.msra.mxu0 0.0
    %1873 = vmatprep.subr.mxu0 0.0
    %1874 = vmatpush1.xpose.msra.mxu0 0.0
    %1875 = vmatprep.subr.mxu0 0.0
    %1876 = vmatpush1.xpose.msra.mxu0 0.0
    %1877 = vmatprep.subr.mxu0 0.0
    %1878 = vmatpush1.xpose.msra.mxu0 0.0
    %1879 = vmatprep.subr.mxu0 0.0
    %1880 = vmatpush1.xpose.msra.mxu0 0.0
    %1881 = vmatprep.subr.mxu0 0.0
    %1882 = vmatpush1.xpose.msra.mxu0 0.0
    %1883 = vmatprep.subr.mxu0 0.0
    %1884 = vmatpush1.xpose.msra.mxu0 0.0
    %1885 = vmatprep.subr.mxu0 0.0
    %1886 = vmatpush1.xpose.msra.mxu0 0.0
    %1887 = vmatprep.subr.mxu0 0.0
    %1888 = vmatpush1.xpose.msra.mxu0 0.0
    %1889 = vmatprep.subr.mxu0 0.0
    %1890 = vmatpush1.xpose.msra.mxu0 0.0
    %1891 = vmatprep.subr.mxu0 0.0
    %1892 = vmatpush1.xpose.msra.mxu0 0.0
    %1893 = vmatprep.subr.mxu0 0.0
    %1894 = vmatpush1.xpose.msra.mxu0 0.0
    %1895 = vmatprep.subr.mxu0 0.0
    %1896 = vmatpush1.xpose.msra.mxu0 0.0
    %1897 = vmatprep.subr.mxu0 0.0
    %1898 = vmatpush1.xpose.msra.mxu0 %v1865
    %1899 = vmatprep.subr.mxu0 0.0
    %1900 = vmatpush2.xpose.msra.mxu0 0.0
    %1901 = vmatprep.subr.mxu0 0.0
    %1902 = vmatpush2.xpose.msra.mxu0 0.0
    %1903 = vmatprep.subr.mxu0 0.0
    %1904 = vmatpush2.xpose.msra.mxu0 0.0
    %1905 = vmatprep.subr.mxu0 0.0
    %1906 = vmatpush2.xpose.msra.mxu0 0.0
    %1907 = vmatprep.subr.mxu0 0.0
    %1908 = vmatpush2.xpose.msra.mxu0 0.0
    %1909 = vmatprep.subr.mxu0 0.0
    %1910 = vmatpush2.xpose.msra.mxu0 0.0
    %1911 = vmatprep.subr.mxu0 0.0
    %1912 = vmatpush2.xpose.msra.mxu0 0.0
    %1913 = vmatprep.subr.mxu0 0.0
    %1914 = vmatpush2.xpose.msra.mxu0 0.0
    %1915 = vmatprep.subr.mxu0 0.0
    %1916 = vmatpush2.xpose.msra.mxu0 0.0
    %1917 = vmatprep.subr.mxu0 0.0
    %1918 = vmatpush2.xpose.msra.mxu0 0.0
    %1919 = vmatprep.subr.mxu0 0.0
    %1920 = vmatpush2.xpose.msra.mxu0 0.0
    %1921 = vmatprep.subr.mxu0 0.0
    %1922 = vmatpush2.xpose.msra.mxu0 0.0
    %1923 = vmatprep.subr.mxu0 0.0
    %1924 = vmatpush2.xpose.msra.mxu0 0.0
    %1925 = vmatprep.subr.mxu0 0.0
    %1926 = vmatpush2.xpose.msra.mxu0 0.0
    %1927 = vmatprep.subr.mxu0 0.0
    %1928 = vmatpush2.xpose.msra.mxu0 0.0
    %1929 = vmatprep.subr.mxu0 0.0
    %1930 = vmatpush2.xpose.msra.mxu0 0.0
    %1931 = vmatprep.mubr.f32.mxu0 0.0
    %1932 = vmatmul.mubr.f32.gmra.mxu0 %v1863
    %v1933 = vpop.f32.mrf.mxu0
    %v1934 = vadd.f32 0.0, %v1933
    %v1935 = vpop.f32.mrf.mxu0
    %1936 = vdwg.mxu0
    %v1937 = vsel %vm264, %v1934, -inf
    %1938 = vmax.xlane.f32.xlu0 %v1937
    %v1939 = vpop.xlane.xlu0 %1938
    %v1940 = vsub.f32 %v1934, %v1939
    %v1941 = vmul.f32 %v1940, 1.442695
    %v1942 = vpow.pop %v1941
    %v1943 = vsel %vm264, %v1942, 0.0
    %1944 = vadd.xlane.f32.xlu0 %v1943
    %v1945 = vpop.xlane.xlu0 %1944
    %v1946 = vrcp.pop %v1945
    %v1947 = vmul.f32 %v1942, %v1946
    %1948 = vrot.lane.b32.xlu0 %v184, 80
    %v1949 = vpop.permute.xlu0 %1948
    %v1952 = vsel %vm264, %v1947, 0
    %1954 = vmatprep.subr.mxu0 0.0
    %1955 = vmatpush1.msra.mxu0 0.0
    %1956 = vmatprep.subr.mxu0 0.0
    %1957 = vmatpush1.msra.mxu0 0.0
    %1958 = vmatprep.subr.mxu0 0.0
    %1959 = vmatpush1.msra.mxu0 0.0
    %1960 = vmatprep.subr.mxu0 0.0
    %1961 = vmatpush1.msra.mxu0 0.0
    %1962 = vmatprep.subr.mxu0 0.0
    %1963 = vmatpush1.msra.mxu0 0.0
    %1964 = vmatprep.subr.mxu0 0.0
    %1965 = vmatpush1.msra.mxu0 0.0
    %1966 = vmatprep.subr.mxu0 0.0
    %1967 = vmatpush1.msra.mxu0 0.0
    %1968 = vmatprep.subr.mxu0 0.0
    %1969 = vmatpush1.msra.mxu0 0.0
    %1970 = vmatprep.subr.mxu0 0.0
    %1971 = vmatpush1.msra.mxu0 0.0
    %1972 = vmatprep.subr.mxu0 0.0
    %1973 = vmatpush1.msra.mxu0 0.0
    %1974 = vmatprep.subr.mxu0 0.0
    %1975 = vmatpush1.msra.mxu0 0.0
    %1976 = vmatprep.subr.mxu0 0.0
    %1977 = vmatpush1.msra.mxu0 0.0
    %1978 = vmatprep.subr.mxu0 0.0
    %1979 = vmatpush1.msra.mxu0 0.0
    %1980 = vmatprep.subr.mxu0 0.0
    %1981 = vmatpush1.msra.mxu0 0.0
    %1982 = vmatprep.subr.mxu0 0.0
    %1983 = vmatpush1.msra.mxu0 0.0
    %1984 = vmatprep.subr.mxu0 0.0
    %1985 = vmatpush1.msra.mxu0 %v1949
    %1986 = vmatprep.subr.mxu0 0.0
    %1987 = vmatpush2.msra.mxu0 0.0
    %1988 = vmatprep.subr.mxu0 0.0
    %1989 = vmatpush2.msra.mxu0 0.0
    %1990 = vmatprep.subr.mxu0 0.0
    %1991 = vmatpush2.msra.mxu0 0.0
    %1992 = vmatprep.subr.mxu0 0.0
    %1993 = vmatpush2.msra.mxu0 0.0
    %1994 = vmatprep.subr.mxu0 0.0
    %1995 = vmatpush2.msra.mxu0 0.0
    %1996 = vmatprep.subr.mxu0 0.0
    %1997 = vmatpush2.msra.mxu0 0.0
    %1998 = vmatprep.subr.mxu0 0.0
    %1999 = vmatpush2.msra.mxu0 0.0
    %2000 = vmatprep.subr.mxu0 0.0
    %2001 = vmatpush2.msra.mxu0 0.0
    %2002 = vmatprep.subr.mxu0 0.0
    %2003 = vmatpush2.msra.mxu0 0.0
    %2004 = vmatprep.subr.mxu0 0.0
    %2005 = vmatpush2.msra.mxu0 0.0
    %2006 = vmatprep.subr.mxu0 0.0
    %2007 = vmatpush2.msra.mxu0 0.0
    %2008 = vmatprep.subr.mxu0 0.0
    %2009 = vmatpush2.msra.mxu0 0.0
    %2010 = vmatprep.subr.mxu0 0.0
    %2011 = vmatpush2.msra.mxu0 0.0
    %2012 = vmatprep.subr.mxu0 0.0
    %2013 = vmatpush2.msra.mxu0 0.0
    %2014 = vmatprep.subr.mxu0 0.0
    %2015 = vmatpush2.msra.mxu0 0.0
    %2016 = vmatprep.subr.mxu0 0.0
    %2017 = vmatpush2.msra.mxu0 0.0
    %2018 = vmatprep.mubr.f32.mxu0 0.0
    %2019 = vmatmul.mubr.f32.gmra.mxu0 %v1952
    %v2020 = vpop.f32.mrf.mxu0
    %v2021 = vadd.f32 0.0, %v2020
    %v2022 = vpop.f32.mrf.mxu0
    %2023 = vdwg.mxu0
    %v2025 = vsel %vm189, %v2021, 0
    %2027 = vmatprep.subr.mxu0 0.0
    %2028 = vmatpush1.msra.mxu0 0.0
    %2029 = vmatprep.subr.mxu0 0.0
    %2030 = vmatpush1.msra.mxu0 0.0
    %2031 = vmatprep.subr.mxu0 0.0
    %2032 = vmatpush1.msra.mxu0 0.0
    %2033 = vmatprep.subr.mxu0 0.0
    %2034 = vmatpush1.msra.mxu0 0.0
    %2035 = vmatprep.subr.mxu0 0.0
    %2036 = vmatpush1.msra.mxu0 0.0
    %2037 = vmatprep.subr.mxu0 0.0
    %2038 = vmatpush1.msra.mxu0 0.0
    %2039 = vmatprep.subr.mxu0 0.0
    %2040 = vmatpush1.msra.mxu0 0.0
    %2041 = vmatprep.subr.mxu0 0.0
    %2042 = vmatpush1.msra.mxu0 0.0
    %2043 = vmatprep.subr.mxu0 0.0
    %2044 = vmatpush1.msra.mxu0 0.0
    %2045 = vmatprep.subr.mxu0 0.0
    %2046 = vmatpush1.msra.mxu0 0.0
    %2047 = vmatprep.subr.mxu0 0.0
    %2048 = vmatpush1.msra.mxu0 0.0
    %2049 = vmatprep.subr.mxu0 0.0
    %2050 = vmatpush1.msra.mxu0 0.0
    %2051 = vmatprep.subr.mxu0 0.0
    %2052 = vmatpush1.msra.mxu0 0.0
    %2053 = vmatprep.subr.mxu0 0.0
    %2054 = vmatpush1.msra.mxu0 0.0
    %2055 = vmatprep.subr.mxu0 0.0
    %2056 = vmatpush1.msra.mxu0 %v1072
    %2057 = vmatprep.subr.mxu0 0.0
    %2058 = vmatpush1.msra.mxu0 %v1071
    %2059 = vmatprep.subr.mxu0 0.0
    %2060 = vmatpush2.msra.mxu0 0.0
    %2061 = vmatprep.subr.mxu0 0.0
    %2062 = vmatpush2.msra.mxu0 0.0
    %2063 = vmatprep.subr.mxu0 0.0
    %2064 = vmatpush2.msra.mxu0 0.0
    %2065 = vmatprep.subr.mxu0 0.0
    %2066 = vmatpush2.msra.mxu0 0.0
    %2067 = vmatprep.subr.mxu0 0.0
    %2068 = vmatpush2.msra.mxu0 0.0
    %2069 = vmatprep.subr.mxu0 0.0
    %2070 = vmatpush2.msra.mxu0 0.0
    %2071 = vmatprep.subr.mxu0 0.0
    %2072 = vmatpush2.msra.mxu0 0.0
    %2073 = vmatprep.subr.mxu0 0.0
    %2074 = vmatpush2.msra.mxu0 0.0
    %2075 = vmatprep.subr.mxu0 0.0
    %2076 = vmatpush2.msra.mxu0 0.0
    %2077 = vmatprep.subr.mxu0 0.0
    %2078 = vmatpush2.msra.mxu0 0.0
    %2079 = vmatprep.subr.mxu0 0.0
    %2080 = vmatpush2.msra.mxu0 0.0
    %2081 = vmatprep.subr.mxu0 0.0
    %2082 = vmatpush2.msra.mxu0 0.0
    %2083 = vmatprep.subr.mxu0 0.0
    %2084 = vmatpush2.msra.mxu0 0.0
    %2085 = vmatprep.subr.mxu0 0.0
    %2086 = vmatpush2.msra.mxu0 0.0
    %2087 = vmatprep.subr.mxu0 0.0
    %2088 = vmatpush2.msra.mxu0 0.0
    %2089 = vmatprep.subr.mxu0 0.0
    %2090 = vmatpush2.msra.mxu0 0.0
    %2091 = vmatprep.mubr.f32.mxu0 0.0
    %2092 = vmatmul.mubr.f32.gmra.mxu0 %v2025
    %v2093 = vpop.f32.mrf.mxu0
    %v2094 = vadd.f32 0.0, %v2093
    %v2095 = vpop.f32.mrf.mxu0
    %2096 = vdwg.mxu0
    %v2097 = vadd.f32 %v1858, %v2094
    %v2098 = vld [vmem:[%s4] sm:$0x1]
    %v2100 = vlaneseq
    %v2101 = vshrl.u32 %v2100, 7
    %v2102 = vsub.s32 0, %v2101
    %v2103 = vrot.slane %v2098, %v2102
    %v2105 = vadd.f32 %v1146, %v2103
    %v2106 = vadd.f32 %v2097, %v2103
    %v2107 = vadd.f32 %v2105, %v58
    %v2108 = vadd.f32 %v2106, %v59
    %v2109 = vld [vmem:[%s5] sm:$0x1]
    %v2110 = vmul.f32 %v2107, %v2107
    %v2111 = vmul.f32 %v2108, %v2108
    %v2112 = vsel %vm63, %v2110, 0.0
    %2113 = vadd.xlane.f32.xlu0 %v2112
    %v2114 = vpop.xlane.xlu0 %2113
    %v2115 = vsel %vm63, %v2111, 0.0
    %2116 = vadd.xlane.f32.xlu0 %v2115
    %v2117 = vpop.xlane.xlu0 %2116
    %v2118 = vmul.f32 %v2114, %v70
    %v2119 = vmul.f32 %v2117, %v70
    %v2120 = vadd.f32 %v2118, 1e-06
    %v2121 = vadd.f32 %v2119, 1e-06
    %v2122 = vrsqrt.pop %v2120
    %v2123 = vrsqrt.pop %v2121
    %v2124 = vmul.f32 %v2107, %v2122
    %v2125 = vmul.f32 %v2108, %v2123
    %v2127 = vlaneseq
    %v2128 = vshrl.u32 %v2127, 7
    %v2129 = vsub.s32 0, %v2128
    %v2130 = vrot.slane %v2109, %v2129
    %v2132 = vmul.f32 %v2124, %v2130
    %v2133 = vmul.f32 %v2125, %v2130
    %v2134 = vld [vmem:[%s6] sm:$0xff]
    %v2135 = vld [vmem:[%s6 + $0x8] sm:$0xff]
    %v2136 = vld [vmem:[%s6 + $0x10] sm:$0xff]
    %v2137 = vld [vmem:[%s6 + $0x18] sm:$0xff]
    %v2138 = vld [vmem:[%s6 + $0x20] sm:$0xff]
    %v2139 = vld [vmem:[%s6 + $0x28] sm:$0xff]
    %v2140 = vld [vmem:[%s6 + $0x30] sm:$0xff]
    %v2141 = vld [vmem:[%s6 + $0x38] sm:$0xff]
    %v2142 = vld [vmem:[%s6 + $0x40] sm:$0xff]
    %v2143 = vld [vmem:[%s6 + $0x48] sm:$0xff]
    %v2144 = vld [vmem:[%s6 + $0x50] sm:$0xff]
    %v2145 = vld [vmem:[%s6 + $0x58] sm:$0xff]
    %v2146 = vld [vmem:[%s6 + $0x60] sm:$0xff]
    %v2147 = vld [vmem:[%s6 + $0x68] sm:$0xff]
    %v2148 = vld [vmem:[%s6 + $0x70] sm:$0xff]
    %v2149 = vld [vmem:[%s6 + $0x78] sm:$0xff]
    %v2150 = vld [vmem:[%s6 + $0x80] sm:$0xff]
    %v2151 = vld [vmem:[%s6 + $0x88] sm:$0xff]
    %v2152 = vld [vmem:[%s6 + $0x90] sm:$0xff]
    %v2153 = vld [vmem:[%s6 + $0x98] sm:$0xff]
    %v2154 = vld [vmem:[%s6 + $0xa0] sm:$0xff]
    %v2155 = vld [vmem:[%s6 + $0xa8] sm:$0xff]
    %v2156 = vld [vmem:[%s6 + $0xb0] sm:$0xff]
    %v2157 = vld [vmem:[%s6 + $0xb8] sm:$0xff]
    %v2158 = vld [vmem:[%s6 + $0xc0] sm:$0xff]
    %v2159 = vld [vmem:[%s6 + $0xc8] sm:$0xff]
    %v2160 = vld [vmem:[%s6 + $0xd0] sm:$0xff]
    %v2161 = vld [vmem:[%s6 + $0xd8] sm:$0xff]
    %v2162 = vld [vmem:[%s6 + $0xe0] sm:$0xff]
    %v2163 = vld [vmem:[%s6 + $0xe8] sm:$0xff]
    %v2164 = vld [vmem:[%s6 + $0xf0] sm:$0xff]
    %v2165 = vld [vmem:[%s6 + $0xf8] sm:$0xff]
    %v2167 = vsel %vm63, %v2132, 0
    %v2170 = vsel %vm63, %v2133, 0
    %2172 = vmatprep.subr.mxu0 0.0
    %2173 = vmatpush1.msra.mxu0 0.0
    %2174 = vmatprep.subr.mxu0 0.0
    %2175 = vmatpush1.msra.mxu0 0.0
    %2176 = vmatprep.subr.mxu0 0.0
    %2177 = vmatpush1.msra.mxu0 0.0
    %2178 = vmatprep.subr.mxu0 0.0
    %2179 = vmatpush1.msra.mxu0 0.0
    %2180 = vmatprep.subr.mxu0 0.0
    %2181 = vmatpush1.msra.mxu0 0.0
    %2182 = vmatprep.subr.mxu0 0.0
    %2183 = vmatpush1.msra.mxu0 0.0
    %2184 = vmatprep.subr.mxu0 0.0
    %2185 = vmatpush1.msra.mxu0 0.0
    %2186 = vmatprep.subr.mxu0 0.0
    %2187 = vmatpush1.msra.mxu0 0.0
    %2188 = vmatprep.subr.mxu0 %v2163
    %2189 = vmatpush1.msra.mxu0 %v2162
    %2190 = vmatprep.subr.mxu0 %v2159
    %2191 = vmatpush1.msra.mxu0 %v2158
    %2192 = vmatprep.subr.mxu0 %v2155
    %2193 = vmatpush1.msra.mxu0 %v2154
    %2194 = vmatprep.subr.mxu0 %v2151
    %2195 = vmatpush1.msra.mxu0 %v2150
    %2196 = vmatprep.subr.mxu0 %v2147
    %2197 = vmatpush1.msra.mxu0 %v2146
    %2198 = vmatprep.subr.mxu0 %v2143
    %2199 = vmatpush1.msra.mxu0 %v2142
    %2200 = vmatprep.subr.mxu0 %v2139
    %2201 = vmatpush1.msra.mxu0 %v2138
    %2202 = vmatprep.subr.mxu0 %v2135
    %2203 = vmatpush1.msra.mxu0 %v2134
    %2204 = vmatprep.subr.mxu0 0.0
    %2205 = vmatpush2.msra.mxu0 0.0
    %2206 = vmatprep.subr.mxu0 0.0
    %2207 = vmatpush2.msra.mxu0 0.0
    %2208 = vmatprep.subr.mxu0 0.0
    %2209 = vmatpush2.msra.mxu0 0.0
    %2210 = vmatprep.subr.mxu0 0.0
    %2211 = vmatpush2.msra.mxu0 0.0
    %2212 = vmatprep.subr.mxu0 0.0
    %2213 = vmatpush2.msra.mxu0 0.0
    %2214 = vmatprep.subr.mxu0 0.0
    %2215 = vmatpush2.msra.mxu0 0.0
    %2216 = vmatprep.subr.mxu0 0.0
    %2217 = vmatpush2.msra.mxu0 0.0
    %2218 = vmatprep.subr.mxu0 0.0
    %2219 = vmatpush2.msra.mxu0 0.0
    %2220 = vmatprep.subr.mxu0 0.0
    %2221 = vmatpush2.msra.mxu0 0.0
    %2222 = vmatprep.subr.mxu0 0.0
    %2223 = vmatpush2.msra.mxu0 0.0
    %2224 = vmatprep.subr.mxu0 0.0
    %2225 = vmatpush2.msra.mxu0 0.0
    %2226 = vmatprep.subr.mxu0 0.0
    %2227 = vmatpush2.msra.mxu0 0.0
    %2228 = vmatprep.subr.mxu0 0.0
    %2229 = vmatpush2.msra.mxu0 0.0
    %2230 = vmatprep.subr.mxu0 0.0
    %2231 = vmatpush2.msra.mxu0 0.0
    %2232 = vmatprep.subr.mxu0 0.0
    %2233 = vmatpush2.msra.mxu0 0.0
    %2234 = vmatprep.subr.mxu0 0.0
    %2235 = vmatpush2.msra.mxu0 0.0
    %2236 = vmatprep.mubr.f32.mxu0 0.0
    %2237 = vmatmul.mubr.f32.gmra.mxu0 %v2167
    %v2238 = vpop.f32.mrf.mxu0
    %v2239 = vadd.f32 0.0, %v2238
    %v2240 = vpop.f32.mrf.mxu0
    %v2241 = vadd.f32 0.0, %v2240
    %2242 = vmatprep.mubr.f32.mxu0 0.0
    %2243 = vmatmul.mubr.f32.gmra.mxu0 %v2170
    %v2244 = vpop.f32.mrf.mxu0
    %v2245 = vadd.f32 0.0, %v2244
    %v2246 = vpop.f32.mrf.mxu0
    %v2247 = vadd.f32 0.0, %v2246
    %2248 = vdwg.mxu0
    %2249 = vmatprep.subr.mxu0 0.0
    %2250 = vmatpush1.msra.mxu0 0.0
    %2251 = vmatprep.subr.mxu0 0.0
    %2252 = vmatpush1.msra.mxu0 0.0
    %2253 = vmatprep.subr.mxu0 0.0
    %2254 = vmatpush1.msra.mxu0 0.0
    %2255 = vmatprep.subr.mxu0 0.0
    %2256 = vmatpush1.msra.mxu0 0.0
    %2257 = vmatprep.subr.mxu0 0.0
    %2258 = vmatpush1.msra.mxu0 0.0
    %2259 = vmatprep.subr.mxu0 0.0
    %2260 = vmatpush1.msra.mxu0 0.0
    %2261 = vmatprep.subr.mxu0 0.0
    %2262 = vmatpush1.msra.mxu0 0.0
    %2263 = vmatprep.subr.mxu0 0.0
    %2264 = vmatpush1.msra.mxu0 0.0
    %2265 = vmatprep.subr.mxu0 %v2165
    %2266 = vmatpush1.msra.mxu0 %v2164
    %2267 = vmatprep.subr.mxu0 %v2161
    %2268 = vmatpush1.msra.mxu0 %v2160
    %2269 = vmatprep.subr.mxu0 %v2157
    %2270 = vmatpush1.msra.mxu0 %v2156
    %2271 = vmatprep.subr.mxu0 %v2153
    %2272 = vmatpush1.msra.mxu0 %v2152
    %2273 = vmatprep.subr.mxu0 %v2149
    %2274 = vmatpush1.msra.mxu0 %v2148
    %2275 = vmatprep.subr.mxu0 %v2145
    %2276 = vmatpush1.msra.mxu0 %v2144
    %2277 = vmatprep.subr.mxu0 %v2141
    %2278 = vmatpush1.msra.mxu0 %v2140
    %2279 = vmatprep.subr.mxu0 %v2137
    %2280 = vmatpush1.msra.mxu0 %v2136
    %2281 = vmatprep.subr.mxu0 0.0
    %2282 = vmatpush2.msra.mxu0 0.0
    %2283 = vmatprep.subr.mxu0 0.0
    %2284 = vmatpush2.msra.mxu0 0.0
    %2285 = vmatprep.subr.mxu0 0.0
    %2286 = vmatpush2.msra.mxu0 0.0
    %2287 = vmatprep.subr.mxu0 0.0
    %2288 = vmatpush2.msra.mxu0 0.0
    %2289 = vmatprep.subr.mxu0 0.0
    %2290 = vmatpush2.msra.mxu0 0.0
    %2291 = vmatprep.subr.mxu0 0.0
    %2292 = vmatpush2.msra.mxu0 0.0
    %2293 = vmatprep.subr.mxu0 0.0
    %2294 = vmatpush2.msra.mxu0 0.0
    %2295 = vmatprep.subr.mxu0 0.0
    %2296 = vmatpush2.msra.mxu0 0.0
    %2297 = vmatprep.subr.mxu0 0.0
    %2298 = vmatpush2.msra.mxu0 0.0
    %2299 = vmatprep.subr.mxu0 0.0
    %2300 = vmatpush2.msra.mxu0 0.0
    %2301 = vmatprep.subr.mxu0 0.0
    %2302 = vmatpush2.msra.mxu0 0.0
    %2303 = vmatprep.subr.mxu0 0.0
    %2304 = vmatpush2.msra.mxu0 0.0
    %2305 = vmatprep.subr.mxu0 0.0
    %2306 = vmatpush2.msra.mxu0 0.0
    %2307 = vmatprep.subr.mxu0 0.0
    %2308 = vmatpush2.msra.mxu0 0.0
    %2309 = vmatprep.subr.mxu0 0.0
    %2310 = vmatpush2.msra.mxu0 0.0
    %2311 = vmatprep.subr.mxu0 0.0
    %2312 = vmatpush2.msra.mxu0 0.0
    %2313 = vmatprep.mubr.f32.mxu0 0.0
    %2314 = vmatmul.mubr.f32.gmra.mxu0 %v2167
    %v2315 = vpop.f32.mrf.mxu0
    %v2316 = vadd.f32 0.0, %v2315
    %v2317 = vpop.f32.mrf.mxu0
    %v2318 = vadd.f32 0.0, %v2317
    %2319 = vmatprep.mubr.f32.mxu0 0.0
    %2320 = vmatmul.mubr.f32.gmra.mxu0 %v2170
    %v2321 = vpop.f32.mrf.mxu0
    %v2322 = vadd.f32 0.0, %v2321
    %v2323 = vpop.f32.mrf.mxu0
    %v2324 = vadd.f32 0.0, %v2323
    %2325 = vdwg.mxu0
    %v2326 = vxor.u32 %v2239, 2147483648
    %v2327 = vxor.u32 %v2241, 2147483648
    %v2328 = vxor.u32 %v2245, 2147483648
    %v2329 = vxor.u32 %v2247, 2147483648
    %v2330 = vmul.f32 %v2326, 1.442695
    %v2331 = vpow.pop %v2330
    %v2332 = vmul.f32 %v2327, 1.442695
    %v2333 = vpow.pop %v2332
    %v2334 = vmul.f32 %v2328, 1.442695
    %v2335 = vpow.pop %v2334
    %v2336 = vmul.f32 %v2329, 1.442695
    %v2337 = vpow.pop %v2336
    %v2338 = vadd.f32 %v2331, 1.0
    %v2339 = vadd.f32 %v2333, 1.0
    %v2340 = vadd.f32 %v2335, 1.0
    %v2341 = vadd.f32 %v2337, 1.0
    %v2342 = vrcp.pop %v2338
    %v2343 = vmul.f32 1.0, %v2342
    %v2344 = vrcp.pop %v2339
    %v2345 = vmul.f32 1.0, %v2344
    %v2346 = vrcp.pop %v2340
    %v2347 = vmul.f32 1.0, %v2346
    %v2348 = vrcp.pop %v2341
    %v2349 = vmul.f32 1.0, %v2348
    %v2350 = vmul.f32 %v2239, %v2343
    %v2351 = vmul.f32 %v2241, %v2345
    %v2352 = vmul.f32 %v2245, %v2347
    %v2353 = vmul.f32 %v2247, %v2349
    %v2354 = vmul.f32 %v2350, %v2316
    %v2355 = vmul.f32 %v2351, %v2318
    %v2356 = vmul.f32 %v2352, %v2322
    %v2357 = vmul.f32 %v2353, %v2324
    %v2358 = vld [vmem:[%s7] sm:$0xff]
    %v2359 = vld [vmem:[%s7 + $0x8] sm:$0xff]
    %v2360 = vld [vmem:[%s7 + $0x10] sm:$0xff]
    %v2361 = vld [vmem:[%s7 + $0x18] sm:$0xff]
    %v2362 = vld [vmem:[%s7 + $0x20] sm:$0xff]
    %v2363 = vld [vmem:[%s7 + $0x28] sm:$0xff]
    %v2364 = vld [vmem:[%s7 + $0x30] sm:$0xff]
    %v2365 = vld [vmem:[%s7 + $0x38] sm:$0xff]
    %v2366 = vld [vmem:[%s7 + $0x40] sm:$0xff]
    %v2367 = vld [vmem:[%s7 + $0x48] sm:$0xff]
    %v2368 = vld [vmem:[%s7 + $0x50] sm:$0xff]
    %v2369 = vld [vmem:[%s7 + $0x58] sm:$0xff]
    %v2370 = vld [vmem:[%s7 + $0x60] sm:$0xff]
    %v2371 = vld [vmem:[%s7 + $0x68] sm:$0xff]
    %v2372 = vld [vmem:[%s7 + $0x70] sm:$0xff]
    %v2373 = vld [vmem:[%s7 + $0x78] sm:$0xff]
    %v2374 = vld [vmem:[%s7 + $0x80] sm:$0xff]
    %v2375 = vld [vmem:[%s7 + $0x88] sm:$0xff]
    %v2376 = vld [vmem:[%s7 + $0x90] sm:$0xff]
    %v2377 = vld [vmem:[%s7 + $0x98] sm:$0xff]
    %v2378 = vld [vmem:[%s7 + $0xa0] sm:$0xff]
    %v2379 = vld [vmem:[%s7 + $0xa8] sm:$0xff]
    %v2380 = vld [vmem:[%s7 + $0xb0] sm:$0xff]
    %v2381 = vld [vmem:[%s7 + $0xb8] sm:$0xff]
    %v2382 = vld [vmem:[%s7 + $0xc0] sm:$0xff]
    %v2383 = vld [vmem:[%s7 + $0xc8] sm:$0xff]
    %v2384 = vld [vmem:[%s7 + $0xd0] sm:$0xff]
    %v2385 = vld [vmem:[%s7 + $0xd8] sm:$0xff]
    %v2386 = vld [vmem:[%s7 + $0xe0] sm:$0xff]
    %v2387 = vld [vmem:[%s7 + $0xe8] sm:$0xff]
    %v2388 = vld [vmem:[%s7 + $0xf0] sm:$0xff]
    %v2389 = vld [vmem:[%s7 + $0xf8] sm:$0xff]
    %2390 = vmatprep.subr.mxu0 0.0
    %2391 = vmatpush1.msra.mxu0 %v2373
    %2392 = vmatprep.subr.mxu0 0.0
    %2393 = vmatpush1.msra.mxu0 %v2372
    %2394 = vmatprep.subr.mxu0 0.0
    %2395 = vmatpush1.msra.mxu0 %v2371
    %2396 = vmatprep.subr.mxu0 0.0
    %2397 = vmatpush1.msra.mxu0 %v2370
    %2398 = vmatprep.subr.mxu0 0.0
    %2399 = vmatpush1.msra.mxu0 %v2369
    %2400 = vmatprep.subr.mxu0 0.0
    %2401 = vmatpush1.msra.mxu0 %v2368
    %2402 = vmatprep.subr.mxu0 0.0
    %2403 = vmatpush1.msra.mxu0 %v2367
    %2404 = vmatprep.subr.mxu0 0.0
    %2405 = vmatpush1.msra.mxu0 %v2366
    %2406 = vmatprep.subr.mxu0 0.0
    %2407 = vmatpush1.msra.mxu0 %v2365
    %2408 = vmatprep.subr.mxu0 0.0
    %2409 = vmatpush1.msra.mxu0 %v2364
    %2410 = vmatprep.subr.mxu0 0.0
    %2411 = vmatpush1.msra.mxu0 %v2363
    %2412 = vmatprep.subr.mxu0 0.0
    %2413 = vmatpush1.msra.mxu0 %v2362
    %2414 = vmatprep.subr.mxu0 0.0
    %2415 = vmatpush1.msra.mxu0 %v2361
    %2416 = vmatprep.subr.mxu0 0.0
    %2417 = vmatpush1.msra.mxu0 %v2360
    %2418 = vmatprep.subr.mxu0 0.0
    %2419 = vmatpush1.msra.mxu0 %v2359
    %2420 = vmatprep.subr.mxu0 0.0
    %2421 = vmatpush1.msra.mxu0 %v2358
    %2422 = vmatprep.subr.mxu0 0.0
    %2423 = vmatpush2.msra.mxu0 %v2389
    %2424 = vmatprep.subr.mxu0 0.0
    %2425 = vmatpush2.msra.mxu0 %v2388
    %2426 = vmatprep.subr.mxu0 0.0
    %2427 = vmatpush2.msra.mxu0 %v2387
    %2428 = vmatprep.subr.mxu0 0.0
    %2429 = vmatpush2.msra.mxu0 %v2386
    %2430 = vmatprep.subr.mxu0 0.0
    %2431 = vmatpush2.msra.mxu0 %v2385
    %2432 = vmatprep.subr.mxu0 0.0
    %2433 = vmatpush2.msra.mxu0 %v2384
    %2434 = vmatprep.subr.mxu0 0.0
    %2435 = vmatpush2.msra.mxu0 %v2383
    %2436 = vmatprep.subr.mxu0 0.0
    %2437 = vmatpush2.msra.mxu0 %v2382
    %2438 = vmatprep.subr.mxu0 0.0
    %2439 = vmatpush2.msra.mxu0 %v2381
    %2440 = vmatprep.subr.mxu0 0.0
    %2441 = vmatpush2.msra.mxu0 %v2380
    %2442 = vmatprep.subr.mxu0 0.0
    %2443 = vmatpush2.msra.mxu0 %v2379
    %2444 = vmatprep.subr.mxu0 0.0
    %2445 = vmatpush2.msra.mxu0 %v2378
    %2446 = vmatprep.subr.mxu0 0.0
    %2447 = vmatpush2.msra.mxu0 %v2377
    %2448 = vmatprep.subr.mxu0 0.0
    %2449 = vmatpush2.msra.mxu0 %v2376
    %2450 = vmatprep.subr.mxu0 0.0
    %2451 = vmatpush2.msra.mxu0 %v2375
    %2452 = vmatprep.subr.mxu0 0.0
    %2453 = vmatpush2.msra.mxu0 %v2374
    %2454 = vmatprep.mubr.f32.mxu0 %v2355
    %2455 = vmatmul.mubr.f32.gmra.mxu0 %v2354
    %v2456 = vpop.f32.mrf.mxu0
    %v2457 = vadd.f32 %v2107, %v2456
    %v2458 = vpop.f32.mrf.mxu0
    %2459 = vmatprep.mubr.f32.mxu0 %v2357
    %2460 = vmatmul.mubr.f32.gmra.mxu0 %v2356
    %v2461 = vpop.f32.mrf.mxu0
    %v2462 = vadd.f32 %v2108, %v2461
    %v2463 = vpop.f32.mrf.mxu0
    %2464 = vdwg.mxu0
    %2465 = vst.msk [vmem:[#allocation7] sm:$0xff] %vm63, %v2457
    %2466 = vst.msk [vmem:[#allocation7 + $0x8] sm:$0xff] %vm63, %v2462
    // Predicated region
    $region42: #{tpu_custom_call.1} parent=1 // pred_check
      _
    $region43: #{tpu_custom_call.1} parent=1 // pred_check_branch
      %2468 = sbr.rel (0) target = $region45
    $region44: #{tpu_custom_call.1} parent=1 // pred_region
      %s2470 = ssub.s32 256, 256
      %2471 = vsyncadd [#allocation4], %s2470
      %s2472 = sshll.u32 [#allocation7], 4
      %s2473 = int_to_ptr.vmem [resolvable:$true] %s2472
      %2478 = dma.vmem_to_hbm [thread:$0]  %s2473, 256, %s8, [#allocation4], 128, 128, 8
    $region45: #{tpu_custom_call.1} parent=1 // pred_fallthru
      _
    // Predicated region
    $region46: #{tpu_custom_call.1} parent=1 // pred_check
      _
    $region47: #{tpu_custom_call.1} parent=1 // pred_check_branch
      %2480 = sbr.rel (0) target = $region49
    $region48: #{tpu_custom_call.1} parent=1 // pred_region
      %2481 = dma.done [#allocation4], 256
    $region49: #{tpu_custom_call.1} parent=1 // pred_fallthru
      _
    %2482 = vsyncpa [#allocation3], 1
    %2483 = vsyncpa [#allocation6], 1
    %2484 = vsyncpa [#allocation4], 1

</llo_original>
